<compile_context>
chip_gen: v6e
topology: v6e:2x2x1
jax: 0.10.0
libtpu: 0.0.40
codegen_flags: <defaults>
</compile_context>

<pallas_src>
import jax
import jax.numpy as jnp
from jax import lax
from jax.experimental import pallas as pl
from jax.experimental.pallas import tpu as pltpu

EPS = 1e-5
COMPUTE_DTYPE = jnp.bfloat16      # MXU operand dtype; accumulation stays f32.
LANE = 128
SUBLANE = 8
ROW_ALIGN = 16                    # bf16 sublane packing granule
ROW_TILE_MAX = 1024               # amortize per-grid-step overhead on the streaming passes
VMEM_TILE_BUDGET = 32 * 1024 * 1024   # budget for double-buffered x/y tiles (+ weights on top)
VMEM_LIMIT_BYTES = 48 * 1024 * 1024   # <= v7x physical 64 MiB; plenty of headroom on v5e/v6e


def _round_up(x, m):
    return (x + m - 1) // m * m


def _cdiv(a, b):
    return -(-a // b)


# ----------------------------- Pallas kernels -----------------------------

def _matmul_stats_kernel(x_ref, w_ref, y_ref, sum_ref, sq_ref):
    """Pass 1: row-tile matmul (bf16 operands, f32 acc) + per-channel partial BN sums.

    Stats are accumulated as (8, Cout_pad) sublane-group partials (pure VALU adds, no in-kernel
    cross-sublane reduction); the final 8-row + per-core reduction is tiny and done in JAX.
    """
    @pl.when(pl.program_id(1) == 0)       # first tile on this core: init resident accumulators
    def _():
        sum_ref[...] = jnp.zeros_like(sum_ref)
        sq_ref[...] = jnp.zeros_like(sq_ref)

    y = jnp.dot(x_ref[...], w_ref[...], preferred_element_type=jnp.float32)
    y3 = y.reshape(y.shape[0] // SUBLANE, SUBLANE, y.shape[1])
    sum_ref[...] += jnp.sum(y3, axis=0)
    sq_ref[...] += jnp.sum(y3 * y3, axis=0)
    y_ref[...] = y.astype(y_ref.dtype)    # bf16 writeback: halves pass-1 HBM store traffic


def _norm_act_kernel(y_ref, scale_ref, shift_ref, o_ref):
    """Pass 2: streaming fused normalize (scale/shift pre-folded) + ReLU."""
    y = y_ref[...].astype(jnp.float32)
    o_ref[...] = jnp.maximum(y * scale_ref[...] + shift_ref[...], 0.0).astype(o_ref.dtype)


# ------------------------------- host wrapper ------------------------------

def _choose_row_tile(rows, k, cout_pad):
    """Balanced row tiling, capped so double-buffered bf16 x/y tiles (+ weights) fit VMEM."""
    bytes_per_row = 2 * 2 * (k + cout_pad)          # double-buffered bf16 x-tile + y-tile
    weight_bytes = 2 * 2 * k * cout_pad             # double-buffered resident bf16 weights
    budget = max(VMEM_TILE_BUDGET - weight_bytes, 2 * 1024 * 1024)
    cap = max(ROW_ALIGN, min(ROW_TILE_MAX, budget // bytes_per_row))
    n_tiles = _cdiv(rows, cap)
    return _round_up(_cdiv(rows, n_tiles), ROW_ALIGN)


def fused_conv_bn_relu(x2d, w2d, gamma, beta, *, out_dtype):
    """ReLU(BatchNorm_train(x2d @ w2d)) with per-channel batch stats over the rows of x2d."""
    rows, k = x2d.shape
    cout = w2d.shape[1]

    # Lane-dense output (unmasked vector stores); 256-aligned for the 256x256 MXU on v6e/v7x
    # when the channel count is large enough to use it.
    cout_pad = _round_up(cout, 256) if cout >= 256 else _round_up(cout, LANE)
    # K is only padded to the 8-sublane granule (usually a no-op).  Full 128/256 K padding is
    # deliberately avoided: it would re-materialize the whole im2col matrix in HBM.
    k_pad = _round_up(k, SUBLANE)

    row_tile = _choose_row_tile(rows, k_pad, cout_pad)
    n_tiles = _cdiv(rows, row_tile)
    n_cores = 2 if n_tiles >= 2 else 1        # megacore split of pass 1 (v7x); harmless on 1 TC
    n_tiles = _round_up(n_tiles, n_cores)
    tiles_per_core = n_tiles // n_cores
    rows_pad = n_tiles * row_tile

    # Zero-padded rows / K columns contribute 0 to the matmul output and hence 0 to the BN sums
    # (possible only because the conv bias is dropped — it is cancelled by BN mean subtraction).
    x_p = x2d.astype(COMPUTE_DTYPE)
    if rows_pad > rows or k_pad > k:
        x_p = jnp.pad(x_p, ((0, rows_pad - rows), (0, k_pad - k)))
    w_p = w2d.astype(COMPUTE_DTYPE)
    if k_pad > k or cout_pad > cout:
        w_p = jnp.pad(w_p, ((0, k_pad - k), (0, cout_pad - cout)))

    # ---- pass 1: matmul + per-core BN partial sums ----
    y, ysum, ysq = pl.pallas_call(
        _matmul_stats_kernel,
        out_shape=(
            jax.ShapeDtypeStruct((rows_pad, cout_pad), COMPUTE_DTYPE),
            jax.ShapeDtypeStruct((n_cores * SUBLANE, cout_pad), jnp.float32),
            jax.ShapeDtypeStruct((n_cores * SUBLANE, cout_pad), jnp.float32),
        ),
        grid=(n_cores, tiles_per_core),
        in_specs=[
            pl.BlockSpec((row_tile, k_pad), lambda c, i: (c * tiles_per_core + i, 0)),
            pl.BlockSpec((k_pad, cout_pad), lambda c, i: (0, 0)),   # weights resident in VMEM
        ],
        out_specs=(
            pl.BlockSpec((row_tile, cout_pad), lambda c, i: (c * tiles_per_core + i, 0)),
            pl.BlockSpec((SUBLANE, cout_pad), lambda c, i: (c, 0)),  # per-core resident accum
            pl.BlockSpec((SUBLANE, cout_pad), lambda c, i: (c, 0)),  # per-core resident accum
        ),
        compiler_params=pltpu.CompilerParams(
            dimension_semantics=("parallel", "arbitrary"),   # cores parallel, tiles accumulate
            vmem_limit_bytes=VMEM_LIMIT_BYTES,
        ),
    )(x_p, w_p)

    # ---- tiny per-channel stats -> folded scale/shift (plain JAX) ----
    nrows = jnp.float32(rows)
    ysum = jnp.sum(ysum, axis=0, keepdims=True)   # reduce 8 sublane groups x n_cores
    ysq = jnp.sum(ysq, axis=0, keepdims=True)
    mean = ysum / nrows
    var = jnp.maximum(ysq / nrows - mean * mean, 0.0)   # biased variance (training-mode BN)
    gamma_p = jnp.pad(gamma.astype(jnp.float32), (0, cout_pad - cout)).reshape(1, cout_pad)
    beta_p = jnp.pad(beta.astype(jnp.float32), (0, cout_pad - cout)).reshape(1, cout_pad)
    scale = gamma_p * lax.rsqrt(var + EPS)
    shift = beta_p - mean * scale

    # ---- pass 2: normalize + affine + ReLU (memory-bound streaming, megacore-sharded) ----
    out = pl.pallas_call(
        _norm_act_kernel,
        out_shape=jax.ShapeDtypeStruct((rows_pad, cout_pad), out_dtype),
        grid=(n_tiles,),
        in_specs=[
            pl.BlockSpec((row_tile, cout_pad), lambda i: (i, 0)),
            pl.BlockSpec((1, cout_pad), lambda i: (0, 0)),
            pl.BlockSpec((1, cout_pad), lambda i: (0, 0)),
        ],
        out_specs=pl.BlockSpec((row_tile, cout_pad), lambda i: (i, 0)),
        compiler_params=pltpu.CompilerParams(
            dimension_semantics=("parallel",),
            vmem_limit_bytes=VMEM_LIMIT_BYTES,
        ),
    )(y, scale, shift)

    return out[:rows, :cout]


# ------------------------------- JAX glue ----------------------------------

def _im2col(x_nhwc, kh, kw, stride, pad):
    xp = jnp.pad(x_nhwc, ((0, 0), (pad, pad), (pad, pad), (0, 0)))
    n, hp, wp, c = xp.shape
    ho = (hp - kh) // stride + 1
    wo = (wp - kw) // stride + 1
    patches = []
    for i in range(kh):          # kernel row (slowest)
        for j in range(kw):      # kernel col
            patches.append(xp[:, i:i + stride * ho:stride, j:j + stride * wo:stride, :])
    cols = jnp.concatenate(patches, axis=-1)          # (n, ho, wo, kh*kw*c), order (kh, kw, cin)
    return cols.reshape(n * ho * wo, kh * kw * c), (n, ho, wo)


def conv_bn_relu_block(x_nhwc, w_oihw, gamma, beta, *, stride, pad, out_dtype):
    cout, cin, kh, kw = w_oihw.shape
    # im2col consumes / emits bf16 directly (feedback: no separate host-side cast+pad copy).
    x2d, (n, ho, wo) = _im2col(x_nhwc.astype(COMPUTE_DTYPE), kh, kw, stride, pad)
    # PyTorch weight (O, I, KH, KW) -> (KH, KW, I, O) -> (KH*KW*I, O), matching im2col order.
    w2d = jnp.transpose(w_oihw, (2, 3, 1, 0)).reshape(kh * kw * cin, cout)
    y2d = fused_conv_bn_relu(x2d, w2d, gamma, beta, out_dtype=out_dtype)
    return y2d.reshape(n, ho, wo, cout)


def unet_layer_down(x_nchw, params):
    # NHWC end-to-end internally; transpose only at the module boundary.
    x = jnp.transpose(x_nchw, (0, 2, 3, 1))
    (w1, _b1, g1, be1), (w2, _b2, g2, be2), (w3, _b3, g3, be3) = params
    # Conv bias (_b*) is intentionally unused: it is exactly cancelled by the training-mode
    # BatchNorm mean subtraction, so the output is identical to PyTorch's Conv+BN+ReLU.
    # Interior blocks stay in bf16 (the next block's MXU matmul consumes bf16 anyway).
    x = conv_bn_relu_block(x, w1, g1, be1, stride=2, pad=1, out_dtype=COMPUTE_DTYPE)  # 4x4/s2
    x = conv_bn_relu_block(x, w2, g2, be2, stride=1, pad=1, out_dtype=COMPUTE_DTYPE)  # 3x3/s1
    x = conv_bn_relu_block(x, w3, g3, be3, stride=1, pad=1, out_dtype=jnp.float32)    # 3x3/s1
    return jnp.transpose(x, (0, 3, 1, 2))


unet_layer_down_jit = jax.jit(unet_layer_down)


# ---------------------- pure-JAX reference (f32, with bias) -----------------

def _ref_block(x_nchw, w, b, g, be, *, stride, pad):
    y = lax.conv_general_dilated(
        x_nchw, w, (stride, stride), [(pad, pad), (pad, pad)],
        dimension_numbers=("NCHW", "OIHW", "NCHW"))
    y = y + b.reshape(1, -1, 1, 1)
    mean = jnp.mean(y, axis=(0, 2, 3), keepdims=True)
    var = jnp.mean(jnp.square(y - mean), axis=(0, 2, 3), keepdims=True)
    y = (y - mean) * lax.rsqrt(var + EPS) * g.reshape(1, -1, 1, 1) + be.reshape(1, -1, 1, 1)
    return jnp.maximum(y, 0.0)


def unet_layer_down_ref(x_nchw, params):
    (w1, b1, g1, be1), (w2, b2, g2, be2), (w3, b3, g3, be3) = params
    x = _ref_block(x_nchw, w1, b1, g1, be1, stride=2, pad=1)
    x = _ref_block(x, w2, b2, g2, be2, stride=1, pad=1)
    x = _ref_block(x, w3, b3, g3, be3, stride=1, pad=1)
    return x


# --------------------------------- main -------------------------------------

if __name__ == "__main__":
    key = jax.random.PRNGKey(0)
    N, C_IN, C_OUT, H, W = 2, 4, 8, 16, 16

    k_x, k1, k2, k3, kb1, kb2, kb3 = jax.random.split(key, 7)
    x = jax.random.normal(k_x, (N, C_IN, H, W), dtype=jnp.float32)

    def conv_params(kw_key, kb_key, cin, cout, ksz):
        w = 0.1 * jax.random.normal(kw_key, (cout, cin, ksz, ksz), dtype=jnp.float32)
        b = 0.1 * jax.random.normal(kb_key, (cout,), dtype=jnp.float32)
        gamma = jnp.ones((cout,), dtype=jnp.float32)   # BatchNorm2d default affine init
        beta = jnp.zeros((cout,), dtype=jnp.float32)
        return (w, b, gamma, beta)

    params = (
        conv_params(k1, kb1, C_IN, C_OUT, 4),
        conv_params(k2, kb2, C_OUT, C_OUT, 3),
        conv_params(k3, kb3, C_OUT, C_OUT, 3),
    )

    out = jax.block_until_ready(unet_layer_down_jit(x, params))
    assert out.shape == (N, C_OUT, H // 2, W // 2), out.shape

    ref = jax.block_until_ready(unet_layer_down_ref(x, params))
    # bf16 MXU operands and bf16 intermediates vs. the f32 reference -> loosened tolerance.
    max_err = float(jnp.max(jnp.abs(out - ref)))
    assert jnp.allclose(out, ref, atol=5e-2, rtol=5e-2), max_err

    print("KERNEL_OK")
</pallas_src>

<mosaic_0001>
module attributes {stable_mosaic.version = 11 : i64} {
  func.func @_norm_act_kernel(%arg0: i32, %arg1: memref<128x128xbf16, #tpu.memory_space<vmem>>, %arg2: memref<1x128xf32, #tpu.memory_space<vmem>>, %arg3: memref<1x128xf32, #tpu.memory_space<vmem>>, %arg4: memref<128x128xbf16, #tpu.memory_space<vmem>>) attributes {dimension_semantics = [#tpu.dimension_semantics<parallel>], iteration_bounds = array<i64: 1>, scalar_prefetch = 0 : i64, scratch_operands = 0 : i64, tpu.core_type = #tpu.core_type<tc>, window_params = [{transform_indices = @transform_0, window_bounds = array<i64: 128, 128>}, {pipeline_mode = #tpu.pipeline_mode<synchronous>, transform_indices = @transform_1, window_bounds = array<i64: 1, 128>}, {pipeline_mode = #tpu.pipeline_mode<synchronous>, transform_indices = @transform_2, window_bounds = array<i64: 1, 128>}, {transform_indices = @transform_3, window_bounds = array<i64: 128, 128>}]} {
    %c0 = arith.constant 0 : index
    %c0_0 = arith.constant 0 : index
    %0 = vector.load %arg1[%c0, %c0_0] : memref<128x128xbf16, #tpu.memory_space<vmem>>, vector<128x128xbf16>
    %1 = arith.extf %0 : vector<128x128xbf16> to vector<128x128xf32>
    %c0_1 = arith.constant 0 : index
    %c0_2 = arith.constant 0 : index
    %2 = vector.load %arg2[%c0_1, %c0_2] : memref<1x128xf32, #tpu.memory_space<vmem>>, vector<1x128xf32>
    %3 = vector.broadcast %2 : vector<1x128xf32> to vector<128x128xf32>
    %4 = arith.mulf %1, %3 : vector<128x128xf32>
    %c0_3 = arith.constant 0 : index
    %c0_4 = arith.constant 0 : index
    %5 = vector.load %arg3[%c0_3, %c0_4] : memref<1x128xf32, #tpu.memory_space<vmem>>, vector<1x128xf32>
    %6 = vector.broadcast %5 : vector<1x128xf32> to vector<128x128xf32>
    %7 = arith.addf %4, %6 : vector<128x128xf32>
    %cst = arith.constant 0.000000e+00 : f32
    %8 = vector.broadcast %cst : f32 to vector<128x128xf32>
    %9 = arith.maximumf %7, %8 : vector<128x128xf32>
    %10 = arith.truncf %9 : vector<128x128xf32> to vector<128x128xbf16>
    %c0_5 = arith.constant 0 : index
    %c0_6 = arith.constant 0 : index
    %11 = vector.load %arg4[%c0_5, %c0_6] : memref<128x128xbf16, #tpu.memory_space<vmem>>, vector<128x128xbf16>
    tpu.vector_store %arg4[%c0_5, %c0_6], %10 {strides = array<i32>} : memref<128x128xbf16, #tpu.memory_space<vmem>>, vector<128x128xbf16>,
    return
  }
  func.func @transform_0(%arg0: i32) -> (i32, i32) {
    %c0_i32 = arith.constant 0 : i32
    %c0_i32_0 = arith.constant 0 : i32
    return %arg0, %c0_i32 : i32, i32
  }
  func.func @transform_1(%arg0: i32) -> (i32, i32) {
    %c0_i32 = arith.constant 0 : i32
    %c0_i32_0 = arith.constant 0 : i32
    %c0_i32_1 = arith.constant 0 : i32
    return %c0_i32, %c0_i32_0 : i32, i32
  }
  func.func @transform_2(%arg0: i32) -> (i32, i32) {
    %c0_i32 = arith.constant 0 : i32
    %c0_i32_0 = arith.constant 0 : i32
    %c0_i32_1 = arith.constant 0 : i32
    return %c0_i32, %c0_i32_0 : i32, i32
  }
  func.func @transform_3(%arg0: i32) -> (i32, i32) {
    %c0_i32 = arith.constant 0 : i32
    %c0_i32_0 = arith.constant 0 : i32
    return %arg0, %c0_i32 : i32, i32
  }
}

module attributes {stable_mosaic.version = 11 : i64} {
  func.func @_matmul_stats_kernel(%arg0: i32, %arg1: i32, %arg2: memref<128x64xbf16, #tpu.memory_space<vmem>>, %arg3: memref<64x128xbf16, #tpu.memory_space<vmem>>, %arg4: memref<128x128xbf16, #tpu.memory_space<vmem>>, %arg5: memref<8x128xf32, #tpu.memory_space<vmem>>, %arg6: memref<8x128xf32, #tpu.memory_space<vmem>>) attributes {dimension_semantics = [#tpu.dimension_semantics<parallel>, #tpu.dimension_semantics<arbitrary>], iteration_bounds = array<i64: 1, 1>, scalar_prefetch = 0 : i64, scratch_operands = 0 : i64, tpu.core_type = #tpu.core_type<tc>, window_params = [{transform_indices = @transform_0, window_bounds = array<i64: 128, 64>}, {pipeline_mode = #tpu.pipeline_mode<synchronous>, transform_indices = @transform_1, window_bounds = array<i64: 64, 128>}, {transform_indices = @transform_2, window_bounds = array<i64: 128, 128>}, {transform_indices = @transform_3, window_bounds = array<i64: 8, 128>}, {transform_indices = @transform_4, window_bounds = array<i64: 8, 128>}]} {
    %c0_i32 = arith.constant 0 : i32
    %0 = arith.cmpi eq, %arg1, %c0_i32 : i32
    %1 = arith.extui %0 : i1 to i32
    %c0_i32_0 = arith.constant 0 : i32
    %2 = arith.cmpi ne, %1, %c0_i32_0 : i32
    scf.if %2 {
      %cst_16 = arith.constant 0.000000e+00 : f32
      %18 = vector.broadcast %cst_16 : f32 to vector<8x128xf32>
      %c0_17 = arith.constant 0 : index
      %c0_18 = arith.constant 0 : index
      %19 = vector.load %arg5[%c0_17, %c0_18] : memref<8x128xf32, #tpu.memory_space<vmem>>, vector<8x128xf32>
      tpu.vector_store %arg5[%c0_17, %c0_18], %18 {strides = array<i32>} : memref<8x128xf32, #tpu.memory_space<vmem>>, vector<8x128xf32>,
      %cst_19 = arith.constant 0.000000e+00 : f32
      %20 = vector.broadcast %cst_19 : f32 to vector<8x128xf32>
      %c0_20 = arith.constant 0 : index
      %c0_21 = arith.constant 0 : index
      %21 = vector.load %arg6[%c0_20, %c0_21] : memref<8x128xf32, #tpu.memory_space<vmem>>, vector<8x128xf32>
      tpu.vector_store %arg6[%c0_20, %c0_21], %20 {strides = array<i32>} : memref<8x128xf32, #tpu.memory_space<vmem>>, vector<8x128xf32>,
    } else {
    }
    %c0 = arith.constant 0 : index
    %c0_1 = arith.constant 0 : index
    %3 = vector.load %arg2[%c0, %c0_1] : memref<128x64xbf16, #tpu.memory_space<vmem>>, vector<128x64xbf16>
    %c0_2 = arith.constant 0 : index
    %c0_3 = arith.constant 0 : index
    %4 = vector.load %arg3[%c0_2, %c0_3] : memref<64x128xbf16, #tpu.memory_space<vmem>>, vector<64x128xbf16>
    %cst = arith.constant dense<0.000000e+00> : vector<128x128xf32>
    %5 = tpu.matmul %3, %4, %cst {dimension_numbers = #tpu.dot_dimension_numbers<[1], [0], [0], [1], [0, 0, 1, 1], [], []>} : vector<128x64xbf16>, vector<64x128xbf16>, vector<128x128xf32> -> vector<128x128xf32>
    %6 = vector.shape_cast %5 : vector<128x128xf32> to vector<16x8x128xf32>
    %c0_4 = arith.constant 0 : index
    %c0_5 = arith.constant 0 : index
    %7 = vector.load %arg5[%c0_4, %c0_5] : memref<8x128xf32, #tpu.memory_space<vmem>>, vector<8x128xf32>
    %cst_6 = arith.constant dense<0.000000e+00> : vector<8x128xf32>
    %8 = vector.multi_reduction <add>, %6, %cst_6 [0] : vector<16x8x128xf32> to vector<8x128xf32>
    %9 = arith.addf %7, %8 : vector<8x128xf32>
    %c0_7 = arith.constant 0 : index
    %c0_8 = arith.constant 0 : index
    %10 = vector.load %arg5[%c0_7, %c0_8] : memref<8x128xf32, #tpu.memory_space<vmem>>, vector<8x128xf32>
    tpu.vector_store %arg5[%c0_7, %c0_8], %9 {strides = array<i32>} : memref<8x128xf32, #tpu.memory_space<vmem>>, vector<8x128xf32>,
    %c0_9 = arith.constant 0 : index
    %c0_10 = arith.constant 0 : index
    %11 = vector.load %arg6[%c0_9, %c0_10] : memref<8x128xf32, #tpu.memory_space<vmem>>, vector<8x128xf32>
    %12 = arith.mulf %6, %6 : vector<16x8x128xf32>
    %cst_11 = arith.constant dense<0.000000e+00> : vector<8x128xf32>
    %13 = vector.multi_reduction <add>, %12, %cst_11 [0] : vector<16x8x128xf32> to vector<8x128xf32>
    %14 = arith.addf %11, %13 : vector<8x128xf32>
    %c0_12 = arith.constant 0 : index
    %c0_13 = arith.constant 0 : index
    %15 = vector.load %arg6[%c0_12, %c0_13] : memref<8x128xf32, #tpu.memory_space<vmem>>, vector<8x128xf32>
    tpu.vector_store %arg6[%c0_12, %c0_13], %14 {strides = array<i32>} : memref<8x128xf32, #tpu.memory_space<vmem>>, vector<8x128xf32>,
    %16 = arith.truncf %5 : vector<128x128xf32> to vector<128x128xbf16>
    %c0_14 = arith.constant 0 : index
    %c0_15 = arith.constant 0 : index
    %17 = vector.load %arg4[%c0_14, %c0_15] : memref<128x128xbf16, #tpu.memory_space<vmem>>, vector<128x128xbf16>
    tpu.vector_store %arg4[%c0_14, %c0_15], %16 {strides = array<i32>} : memref<128x128xbf16, #tpu.memory_space<vmem>>, vector<128x128xbf16>,
    return
  }
  func.func @transform_0(%arg0: i32, %arg1: i32) -> (i32, i32) {
    %c1_i32 = arith.constant 1 : i32
    %0 = arith.muli %arg0, %c1_i32 : i32
    %1 = arith.addi %0, %arg1 : i32
    %c0_i32 = arith.constant 0 : i32
    %c0_i32_0 = arith.constant 0 : i32
    return %1, %c0_i32 : i32, i32
  }
  func.func @transform_1(%arg0: i32, %arg1: i32) -> (i32, i32) {
    %c0_i32 = arith.constant 0 : i32
    %c0_i32_0 = arith.constant 0 : i32
    %c0_i32_1 = arith.constant 0 : i32
    return %c0_i32, %c0_i32_0 : i32, i32
  }
  func.func @transform_2(%arg0: i32, %arg1: i32) -> (i32, i32) {
    %c1_i32 = arith.constant 1 : i32
    %0 = arith.muli %arg0, %c1_i32 : i32
    %1 = arith.addi %0, %arg1 : i32
    %c0_i32 = arith.constant 0 : i32
    %c0_i32_0 = arith.constant 0 : i32
    return %1, %c0_i32 : i32, i32
  }
  func.func @transform_3(%arg0: i32, %arg1: i32) -> (i32, i32) {
    %c0_i32 = arith.constant 0 : i32
    %c0_i32_0 = arith.constant 0 : i32
    return %arg0, %c0_i32 : i32, i32
  }
  func.func @transform_4(%arg0: i32, %arg1: i32) -> (i32, i32) {
    %c0_i32 = arith.constant 0 : i32
    %c0_i32_0 = arith.constant 0 : i32
    return %arg0, %c0_i32 : i32, i32
  }
}

module attributes {stable_mosaic.version = 11 : i64} {
  func.func @_matmul_stats_kernel(%arg0: i32, %arg1: i32, %arg2: memref<128x72xbf16, #tpu.memory_space<vmem>>, %arg3: memref<72x128xbf16, #tpu.memory_space<vmem>>, %arg4: memref<128x128xbf16, #tpu.memory_space<vmem>>, %arg5: memref<8x128xf32, #tpu.memory_space<vmem>>, %arg6: memref<8x128xf32, #tpu.memory_space<vmem>>) attributes {dimension_semantics = [#tpu.dimension_semantics<parallel>, #tpu.dimension_semantics<arbitrary>], iteration_bounds = array<i64: 1, 1>, scalar_prefetch = 0 : i64, scratch_operands = 0 : i64, tpu.core_type = #tpu.core_type<tc>, window_params = [{transform_indices = @transform_0, window_bounds = array<i64: 128, 72>}, {pipeline_mode = #tpu.pipeline_mode<synchronous>, transform_indices = @transform_1, window_bounds = array<i64: 72, 128>}, {transform_indices = @transform_2, window_bounds = array<i64: 128, 128>}, {transform_indices = @transform_3, window_bounds = array<i64: 8, 128>}, {transform_indices = @transform_4, window_bounds = array<i64: 8, 128>}]} {
    %c0_i32 = arith.constant 0 : i32
    %0 = arith.cmpi eq, %arg1, %c0_i32 : i32
    %1 = arith.extui %0 : i1 to i32
    %c0_i32_0 = arith.constant 0 : i32
    %2 = arith.cmpi ne, %1, %c0_i32_0 : i32
    scf.if %2 {
      %cst_16 = arith.constant 0.000000e+00 : f32
      %18 = vector.broadcast %cst_16 : f32 to vector<8x128xf32>
      %c0_17 = arith.constant 0 : index
      %c0_18 = arith.constant 0 : index
      %19 = vector.load %arg5[%c0_17, %c0_18] : memref<8x128xf32, #tpu.memory_space<vmem>>, vector<8x128xf32>
      tpu.vector_store %arg5[%c0_17, %c0_18], %18 {strides = array<i32>} : memref<8x128xf32, #tpu.memory_space<vmem>>, vector<8x128xf32>,
      %cst_19 = arith.constant 0.000000e+00 : f32
      %20 = vector.broadcast %cst_19 : f32 to vector<8x128xf32>
      %c0_20 = arith.constant 0 : index
      %c0_21 = arith.constant 0 : index
      %21 = vector.load %arg6[%c0_20, %c0_21] : memref<8x128xf32, #tpu.memory_space<vmem>>, vector<8x128xf32>
      tpu.vector_store %arg6[%c0_20, %c0_21], %20 {strides = array<i32>} : memref<8x128xf32, #tpu.memory_space<vmem>>, vector<8x128xf32>,
    } else {
    }
    %c0 = arith.constant 0 : index
    %c0_1 = arith.constant 0 : index
    %3 = vector.load %arg2[%c0, %c0_1] : memref<128x72xbf16, #tpu.memory_space<vmem>>, vector<128x72xbf16>
    %c0_2 = arith.constant 0 : index
    %c0_3 = arith.constant 0 : index
    %4 = vector.load %arg3[%c0_2, %c0_3] : memref<72x128xbf16, #tpu.memory_space<vmem>>, vector<72x128xbf16>
    %cst = arith.constant dense<0.000000e+00> : vector<128x128xf32>
    %5 = tpu.matmul %3, %4, %cst {dimension_numbers = #tpu.dot_dimension_numbers<[1], [0], [0], [1], [0, 0, 1, 1], [], []>} : vector<128x72xbf16>, vector<72x128xbf16>, vector<128x128xf32> -> vector<128x128xf32>
    %6 = vector.shape_cast %5 : vector<128x128xf32> to vector<16x8x128xf32>
    %c0_4 = arith.constant 0 : index
    %c0_5 = arith.constant 0 : index
    %7 = vector.load %arg5[%c0_4, %c0_5] : memref<8x128xf32, #tpu.memory_space<vmem>>, vector<8x128xf32>
    %cst_6 = arith.constant dense<0.000000e+00> : vector<8x128xf32>
    %8 = vector.multi_reduction <add>, %6, %cst_6 [0] : vector<16x8x128xf32> to vector<8x128xf32>
    %9 = arith.addf %7, %8 : vector<8x128xf32>
    %c0_7 = arith.constant 0 : index
    %c0_8 = arith.constant 0 : index
    %10 = vector.load %arg5[%c0_7, %c0_8] : memref<8x128xf32, #tpu.memory_space<vmem>>, vector<8x128xf32>
    tpu.vector_store %arg5[%c0_7, %c0_8], %9 {strides = array<i32>} : memref<8x128xf32, #tpu.memory_space<vmem>>, vector<8x128xf32>,
    %c0_9 = arith.constant 0 : index
    %c0_10 = arith.constant 0 : index
    %11 = vector.load %arg6[%c0_9, %c0_10] : memref<8x128xf32, #tpu.memory_space<vmem>>, vector<8x128xf32>
    %12 = arith.mulf %6, %6 : vector<16x8x128xf32>
    %cst_11 = arith.constant dense<0.000000e+00> : vector<8x128xf32>
    %13 = vector.multi_reduction <add>, %12, %cst_11 [0] : vector<16x8x128xf32> to vector<8x128xf32>
    %14 = arith.addf %11, %13 : vector<8x128xf32>
    %c0_12 = arith.constant 0 : index
    %c0_13 = arith.constant 0 : index
    %15 = vector.load %arg6[%c0_12, %c0_13] : memref<8x128xf32, #tpu.memory_space<vmem>>, vector<8x128xf32>
    tpu.vector_store %arg6[%c0_12, %c0_13], %14 {strides = array<i32>} : memref<8x128xf32, #tpu.memory_space<vmem>>, vector<8x128xf32>,
    %16 = arith.truncf %5 : vector<128x128xf32> to vector<128x128xbf16>
    %c0_14 = arith.constant 0 : index
    %c0_15 = arith.constant 0 : index
    %17 = vector.load %arg4[%c0_14, %c0_15] : memref<128x128xbf16, #tpu.memory_space<vmem>>, vector<128x128xbf16>
    tpu.vector_store %arg4[%c0_14, %c0_15], %16 {strides = array<i32>} : memref<128x128xbf16, #tpu.memory_space<vmem>>, vector<128x128xbf16>,
    return
  }
  func.func @transform_0(%arg0: i32, %arg1: i32) -> (i32, i32) {
    %c1_i32 = arith.constant 1 : i32
    %0 = arith.muli %arg0, %c1_i32 : i32
    %1 = arith.addi %0, %arg1 : i32
    %c0_i32 = arith.constant 0 : i32
    %c0_i32_0 = arith.constant 0 : i32
    return %1, %c0_i32 : i32, i32
  }
  func.func @transform_1(%arg0: i32, %arg1: i32) -> (i32, i32) {
    %c0_i32 = arith.constant 0 : i32
    %c0_i32_0 = arith.constant 0 : i32
    %c0_i32_1 = arith.constant 0 : i32
    return %c0_i32, %c0_i32_0 : i32, i32
  }
  func.func @transform_2(%arg0: i32, %arg1: i32) -> (i32, i32) {
    %c1_i32 = arith.constant 1 : i32
    %0 = arith.muli %arg0, %c1_i32 : i32
    %1 = arith.addi %0, %arg1 : i32
    %c0_i32 = arith.constant 0 : i32
    %c0_i32_0 = arith.constant 0 : i32
    return %1, %c0_i32 : i32, i32
  }
  func.func @transform_3(%arg0: i32, %arg1: i32) -> (i32, i32) {
    %c0_i32 = arith.constant 0 : i32
    %c0_i32_0 = arith.constant 0 : i32
    return %arg0, %c0_i32 : i32, i32
  }
  func.func @transform_4(%arg0: i32, %arg1: i32) -> (i32, i32) {
    %c0_i32 = arith.constant 0 : i32
    %c0_i32_0 = arith.constant 0 : i32
    return %arg0, %c0_i32 : i32, i32
  }
}

module attributes {stable_mosaic.version = 11 : i64} {
  func.func @_norm_act_kernel(%arg0: i32, %arg1: memref<128x128xbf16, #tpu.memory_space<vmem>>, %arg2: memref<1x128xf32, #tpu.memory_space<vmem>>, %arg3: memref<1x128xf32, #tpu.memory_space<vmem>>, %arg4: memref<128x128xf32, #tpu.memory_space<vmem>>) attributes {dimension_semantics = [#tpu.dimension_semantics<parallel>], iteration_bounds = array<i64: 1>, scalar_prefetch = 0 : i64, scratch_operands = 0 : i64, tpu.core_type = #tpu.core_type<tc>, window_params = [{transform_indices = @transform_0, window_bounds = array<i64: 128, 128>}, {pipeline_mode = #tpu.pipeline_mode<synchronous>, transform_indices = @transform_1, window_bounds = array<i64: 1, 128>}, {pipeline_mode = #tpu.pipeline_mode<synchronous>, transform_indices = @transform_2, window_bounds = array<i64: 1, 128>}, {transform_indices = @transform_3, window_bounds = array<i64: 128, 128>}]} {
    %c0 = arith.constant 0 : index
    %c0_0 = arith.constant 0 : index
    %0 = vector.load %arg1[%c0, %c0_0] : memref<128x128xbf16, #tpu.memory_space<vmem>>, vector<128x128xbf16>
    %1 = arith.extf %0 : vector<128x128xbf16> to vector<128x128xf32>
    %c0_1 = arith.constant 0 : index
    %c0_2 = arith.constant 0 : index
    %2 = vector.load %arg2[%c0_1, %c0_2] : memref<1x128xf32, #tpu.memory_space<vmem>>, vector<1x128xf32>
    %3 = vector.broadcast %2 : vector<1x128xf32> to vector<128x128xf32>
    %4 = arith.mulf %1, %3 : vector<128x128xf32>
    %c0_3 = arith.constant 0 : index
    %c0_4 = arith.constant 0 : index
    %5 = vector.load %arg3[%c0_3, %c0_4] : memref<1x128xf32, #tpu.memory_space<vmem>>, vector<1x128xf32>
    %6 = vector.broadcast %5 : vector<1x128xf32> to vector<128x128xf32>
    %7 = arith.addf %4, %6 : vector<128x128xf32>
    %cst = arith.constant 0.000000e+00 : f32
    %8 = vector.broadcast %cst : f32 to vector<128x128xf32>
    %9 = arith.maximumf %7, %8 : vector<128x128xf32>
    %c0_5 = arith.constant 0 : index
    %c0_6 = arith.constant 0 : index
    %10 = vector.load %arg4[%c0_5, %c0_6] : memref<128x128xf32, #tpu.memory_space<vmem>>, vector<128x128xf32>
    tpu.vector_store %arg4[%c0_5, %c0_6], %9 {strides = array<i32>} : memref<128x128xf32, #tpu.memory_space<vmem>>, vector<128x128xf32>,
    return
  }
  func.func @transform_0(%arg0: i32) -> (i32, i32) {
    %c0_i32 = arith.constant 0 : i32
    %c0_i32_0 = arith.constant 0 : i32
    return %arg0, %c0_i32 : i32, i32
  }
  func.func @transform_1(%arg0: i32) -> (i32, i32) {
    %c0_i32 = arith.constant 0 : i32
    %c0_i32_0 = arith.constant 0 : i32
    %c0_i32_1 = arith.constant 0 : i32
    return %c0_i32, %c0_i32_0 : i32, i32
  }
  func.func @transform_2(%arg0: i32) -> (i32, i32) {
    %c0_i32 = arith.constant 0 : i32
    %c0_i32_0 = arith.constant 0 : i32
    %c0_i32_1 = arith.constant 0 : i32
    return %c0_i32, %c0_i32_0 : i32, i32
  }
  func.func @transform_3(%arg0: i32) -> (i32, i32) {
    %c0_i32 = arith.constant 0 : i32
    %c0_i32_0 = arith.constant 0 : i32
    return %arg0, %c0_i32 : i32, i32
  }
}

</mosaic_0001>

<llo_original>
// kernel: unet_layer_down.7
$region0: #{unet_layer_down.7}
  #allocation0 [shape = 'u32[]', space=smem, size = 0x4, offset = 0x4, fixed_abs, tag = 'smem constant byte address 0x4 - core index']
  #allocation1 [shape = 'u32[144,128]{1,0:T(1,128)}', space=vmem, size = 0x12000, scoped, tag = 'internal scratch']
  %s0 = inlined_call_operand.vmem [shape: bf16[128,128], index: 0, kind: input, shape index: {}]
  %s1 = inlined_call_operand.vmem [shape: f32[1,128], index: 1, kind: input, shape index: {}]
  %s2 = inlined_call_operand.vmem [shape: f32[1,128], index: 2, kind: input, shape index: {}]
  %s3 = inlined_call_operand.vmem [shape: bf16[128,128], index: 3, kind: output, shape index: {}]
  %s4 = sld [smem:[#allocation0]]
  $region22: #{unet_layer_down.7} parent=0
    _
  %s6 = ssub.s32 1, %s4
  %s7 = scalar_select 0, %s6, %s4
  // Predicated region
  $region2: #{unet_layer_down.7} parent=0 // pred_check
    _
  $region3: #{unet_layer_down.7} parent=0 // pred_check_branch
    %9 = sbr.rel (0) target = $region5
  $region4: #{unet_layer_down.7} parent=0 // pred_region
    _
  $region5: #{unet_layer_down.7} parent=0 // pred_fallthru
    _
  // Predicated region
  $region6: #{unet_layer_down.7} parent=0 // pred_check
    _
  $region7: #{unet_layer_down.7} parent=0 // pred_check_branch
    %11 = sbr.rel (0) target = $region9
  $region8: #{unet_layer_down.7} parent=0 // pred_region
    _
  $region9: #{unet_layer_down.7} parent=0 // pred_fallthru
    _
  // Predicated region
  $region10: #{unet_layer_down.7} parent=0 // pred_check
    _
  $region11: #{unet_layer_down.7} parent=0 // pred_check_branch
    %13 = sbr.rel (0) target = $region13
  $region12: #{unet_layer_down.7} parent=0 // pred_region
    _
  $region13: #{unet_layer_down.7} parent=0 // pred_fallthru
    _
  %v14 = vld [vmem:[%s0] sm:$0xf]
  %v15 = vld [vmem:[%s0 + $0x4] sm:$0xf]
  %v16 = vld [vmem:[%s0 + $0x8] sm:$0xf]
  %v17 = vld [vmem:[%s0 + $0xc] sm:$0xf]
  %v18 = vld [vmem:[%s0 + $0x10] sm:$0xf]
  %v19 = vld [vmem:[%s0 + $0x14] sm:$0xf]
  %v20 = vld [vmem:[%s0 + $0x18] sm:$0xf]
  %v21 = vld [vmem:[%s0 + $0x1c] sm:$0xf]
  %v22 = vld [vmem:[%s0 + $0x20] sm:$0xf]
  %v23 = vld [vmem:[%s0 + $0x24] sm:$0xf]
  %v24 = vld [vmem:[%s0 + $0x28] sm:$0xf]
  %v25 = vld [vmem:[%s0 + $0x2c] sm:$0xf]
  %v26 = vld [vmem:[%s0 + $0x30] sm:$0xf]
  %v27 = vld [vmem:[%s0 + $0x34] sm:$0xf]
  %v28 = vld [vmem:[%s0 + $0x38] sm:$0xf]
  %v29 = vld [vmem:[%s0 + $0x3c] sm:$0xf]
  %v30 = vunpack.c.l.bf16 %v14
  %v31 = vunpack.c.l.bf16 %v15
  %v32 = vunpack.c.l.bf16 %v16
  %v33 = vunpack.c.l.bf16 %v17
  %v34 = vunpack.c.l.bf16 %v18
  %v35 = vunpack.c.l.bf16 %v19
  %v36 = vunpack.c.l.bf16 %v20
  %v37 = vunpack.c.l.bf16 %v21
  %v38 = vunpack.c.l.bf16 %v22
  %v39 = vunpack.c.l.bf16 %v23
  %v40 = vunpack.c.l.bf16 %v24
  %v41 = vunpack.c.l.bf16 %v25
  %v42 = vunpack.c.l.bf16 %v26
  %v43 = vunpack.c.l.bf16 %v27
  %v44 = vunpack.c.l.bf16 %v28
  %v45 = vunpack.c.l.bf16 %v29
  %v46 = vld [vmem:[%s1] sm:$0x1]
  %v48 = vlaneseq
  %v49 = vshrl.u32 %v48, 7
  %v50 = vsub.s32 0, %v49
  %v51 = vrot.slane %v46, %v50
  %v53 = vmul.f32 %v30, %v51
  %v54 = vmul.f32 %v31, %v51
  %v55 = vmul.f32 %v32, %v51
  %v56 = vmul.f32 %v33, %v51
  %v57 = vmul.f32 %v34, %v51
  %v58 = vmul.f32 %v35, %v51
  %v59 = vmul.f32 %v36, %v51
  %v60 = vmul.f32 %v37, %v51
  %v61 = vmul.f32 %v38, %v51
  %v62 = vmul.f32 %v39, %v51
  %v63 = vmul.f32 %v40, %v51
  %v64 = vmul.f32 %v41, %v51
  %v65 = vmul.f32 %v42, %v51
  %v66 = vmul.f32 %v43, %v51
  %v67 = vmul.f32 %v44, %v51
  %v68 = vmul.f32 %v45, %v51
  %v69 = vld [vmem:[%s2] sm:$0x1]
  %v71 = vlaneseq
  %v72 = vshrl.u32 %v71, 7
  %v73 = vsub.s32 0, %v72
  %v74 = vrot.slane %v69, %v73
  %v76 = vadd.f32 %v53, %v74
  %v77 = vadd.f32 %v54, %v74
  %v78 = vadd.f32 %v55, %v74
  %v79 = vadd.f32 %v56, %v74
  %v80 = vadd.f32 %v57, %v74
  %v81 = vadd.f32 %v58, %v74
  %v82 = vadd.f32 %v59, %v74
  %v83 = vadd.f32 %v60, %v74
  %v84 = vadd.f32 %v61, %v74
  %v85 = vadd.f32 %v62, %v74
  %v86 = vadd.f32 %v63, %v74
  %v87 = vadd.f32 %v64, %v74
  %v88 = vadd.f32 %v65, %v74
  %v89 = vadd.f32 %v66, %v74
  %v90 = vadd.f32 %v67, %v74
  %v91 = vadd.f32 %v68, %v74
  %v92 = vmax.f32 %v76, 0.0
  %v93 = vmax.f32 %v77, 0.0
  %v94 = vmax.f32 %v78, 0.0
  %v95 = vmax.f32 %v79, 0.0
  %v96 = vmax.f32 %v80, 0.0
  %v97 = vmax.f32 %v81, 0.0
  %v98 = vmax.f32 %v82, 0.0
  %v99 = vmax.f32 %v83, 0.0
  %v100 = vmax.f32 %v84, 0.0
  %v101 = vmax.f32 %v85, 0.0
  %v102 = vmax.f32 %v86, 0.0
  %v103 = vmax.f32 %v87, 0.0
  %v104 = vmax.f32 %v88, 0.0
  %v105 = vmax.f32 %v89, 0.0
  %v106 = vmax.f32 %v90, 0.0
  %v107 = vmax.f32 %v91, 0.0
  %v108 = vpack.c.bf16 %v93, %v92
  %v109 = vpack.c.bf16 %v95, %v94
  %v110 = vpack.c.bf16 %v97, %v96
  %v111 = vpack.c.bf16 %v99, %v98
  %v112 = vpack.c.bf16 %v101, %v100
  %v113 = vpack.c.bf16 %v103, %v102
  %v114 = vpack.c.bf16 %v105, %v104
  %v115 = vpack.c.bf16 %v107, %v106
  %v124 = vunpack.c.l.b16 %v108
  %v125 = vunpack.c.h.b16 %v108
  %v126 = vunpack.c.l.b16 %v109
  %v127 = vunpack.c.h.b16 %v109
  %v128 = vunpack.c.l.b16 %v110
  %v129 = vunpack.c.h.b16 %v110
  %v130 = vunpack.c.l.b16 %v111
  %v131 = vunpack.c.h.b16 %v111
  %v132 = vunpack.c.l.b16 %v112
  %v133 = vunpack.c.h.b16 %v112
  %v134 = vunpack.c.l.b16 %v113
  %v135 = vunpack.c.h.b16 %v113
  %v136 = vunpack.c.l.b16 %v114
  %v137 = vunpack.c.h.b16 %v114
  %v138 = vunpack.c.l.b16 %v115
  %v139 = vunpack.c.h.b16 %v115
  %v140 = vpack.c.b16 %v124, %v124
  %v141 = vpack.c.b16 %v125, %v125
  %v142 = vpack.c.b16 %v126, %v126
  %v143 = vpack.c.b16 %v127, %v127
  %v144 = vpack.c.b16 %v128, %v128
  %v145 = vpack.c.b16 %v129, %v129
  %v146 = vpack.c.b16 %v130, %v130
  %v147 = vpack.c.b16 %v131, %v131
  %v148 = vpack.c.b16 %v132, %v132
  %v149 = vpack.c.b16 %v133, %v133
  %v150 = vpack.c.b16 %v134, %v134
  %v151 = vpack.c.b16 %v135, %v135
  %v152 = vpack.c.b16 %v136, %v136
  %v153 = vpack.c.b16 %v137, %v137
  %v154 = vpack.c.b16 %v138, %v138
  %v155 = vpack.c.b16 %v139, %v139
  %172 = vst [vmem:[%s3] sm:$0xf] %v140
  %173 = vst [vmem:[%s3 + $0x4] sm:$0xf] %v141
  %174 = vst [vmem:[%s3 + $0x8] sm:$0xf] %v142
  %175 = vst [vmem:[%s3 + $0xc] sm:$0xf] %v143
  %176 = vst [vmem:[%s3 + $0x10] sm:$0xf] %v144
  %177 = vst [vmem:[%s3 + $0x14] sm:$0xf] %v145
  %178 = vst [vmem:[%s3 + $0x18] sm:$0xf] %v146
  %179 = vst [vmem:[%s3 + $0x1c] sm:$0xf] %v147
  %180 = vst [vmem:[%s3 + $0x20] sm:$0xf] %v148
  %181 = vst [vmem:[%s3 + $0x24] sm:$0xf] %v149
  %182 = vst [vmem:[%s3 + $0x28] sm:$0xf] %v150
  %183 = vst [vmem:[%s3 + $0x2c] sm:$0xf] %v151
  %184 = vst [vmem:[%s3 + $0x30] sm:$0xf] %v152
  %185 = vst [vmem:[%s3 + $0x34] sm:$0xf] %v153
  %186 = vst [vmem:[%s3 + $0x38] sm:$0xf] %v154
  %187 = vst [vmem:[%s3 + $0x3c] sm:$0xf] %v155
  // Predicated region
  $region14: #{unet_layer_down.7} parent=0 // pred_check
    _
  $region15: #{unet_layer_down.7} parent=0 // pred_check_branch
    %189 = sbr.rel (0) target = $region17
  $region16: #{unet_layer_down.7} parent=0 // pred_region
    _
  $region17: #{unet_layer_down.7} parent=0 // pred_fallthru
    _
  // Predicated region
  $region18: #{unet_layer_down.7} parent=0 // pred_check
    _
  $region19: #{unet_layer_down.7} parent=0 // pred_check_branch
    %191 = sbr.rel (0) target = $region21
  $region20: #{unet_layer_down.7} parent=0 // pred_region
    _
  $region21: #{unet_layer_down.7} parent=0 // pred_fallthru
    _

// kernel: unet_layer_down.6
$region0: #{unet_layer_down.6}
  #allocation0 [shape = 'u32[]', space=smem, size = 0x4, offset = 0x4, fixed_abs, tag = 'smem constant byte address 0x4 - core index']
  #allocation1 [shape = 'u32[144,128]{1,0:T(1,128)}', space=vmem, size = 0x12000, scoped, tag = 'internal scratch']
  %s0 = inlined_call_operand.vmem [shape: bf16[128,64], index: 0, kind: input, shape index: {}]
  %s1 = inlined_call_operand.vmem [shape: bf16[64,128], index: 1, kind: input, shape index: {}]
  %s2 = inlined_call_operand.vmem [shape: bf16[128,128], index: 2, kind: output, shape index: {0}]
  %s3 = inlined_call_operand.vmem [shape: f32[8,128], index: 3, kind: output, shape index: {1}]
  %s4 = inlined_call_operand.vmem [shape: f32[8,128], index: 4, kind: output, shape index: {2}]
  %5 = xla_tuple %s2, %s3, %s4
  %s6 = sld [smem:[#allocation0]]
  $region38: #{unet_layer_down.6} parent=0
    _
  %s8 = ssub.s32 1, %s6
  %s9 = scalar_select 0, %s8, %s6
  // Predicated region
  $region2: #{unet_layer_down.6} parent=0 // pred_check
    _
  $region3: #{unet_layer_down.6} parent=0 // pred_check_branch
    %11 = sbr.rel (0) target = $region5
  $region4: #{unet_layer_down.6} parent=0 // pred_region
    %s12 = sadd.s32 0, 0
    %s13 = smul.u32 16, %s12
    %p14 = scmp.lt.s32.totalorder %s13, 15
    %s15 = scalar_select %p14, %s13, 15
    %s16 = smul.addr %s15, 4
    %s17 = scalar_lea.vmem %s0, %s16
    %s18 = sadd.s32 0, 0
    %s19 = smul.u32 16, %s18
  $region5: #{unet_layer_down.6} parent=0 // pred_fallthru
    _
  // Predicated region
  $region6: #{unet_layer_down.6} parent=0 // pred_check
    _
  $region7: #{unet_layer_down.6} parent=0 // pred_check_branch
    %21 = sbr.rel (0) target = $region9
  $region8: #{unet_layer_down.6} parent=0 // pred_region
    _
  $region9: #{unet_layer_down.6} parent=0 // pred_fallthru
    _
  %s22 = sadd.s32 0, 0
  %s23 = smul.u32 16, %s22
  %p24 = scmp.lt.s32.totalorder %s23, 15
  %s25 = scalar_select %p24, %s23, 15
  %s26 = smul.addr %s25, 4
  %s27 = scalar_lea.vmem %s0, %s26
  %s28 = sadd.s32 0, 0
  %s29 = smul.u32 16, %s28
  %p30 = scmp.lt.s32.totalorder %s29, 15
  %s31 = scalar_select %p30, %s29, 15
  %s32 = smul.addr %s31, 4
  %s33 = scalar_lea.vmem %s2, %s32
  %s34 = sadd.s32 0, 0
  %s35 = smul.u32 16, %s34
  %p36 = scmp.lt.s32.totalorder %s35, 15
  %s37 = scalar_select %p36, %s35, 15
  %s38 = smul.addr %s37, 4
  %s39 = scalar_lea.vmem %s0, %s38
  %s40 = sadd.s32 0, 0
  %s41 = smul.u32 16, %s40
  %s42 = sadd.s32 0, 0
  %s43 = smul.u32 16, %s42
  %p44 = scmp.lt.s32.totalorder %s43, 15
  %s45 = scalar_select %p44, %s43, 15
  %s46 = smul.addr %s45, 4
  %s47 = scalar_lea.vmem %s2, %s46
  %s48 = sadd.s32 0, 0
  %s49 = smul.u32 16, %s48
  %p51 = scmp.eq.s32.totalorder 0, 0
  // Predicated region
  $region10: #{unet_layer_down.6} parent=0 // pred_check
    %p52 = pneg %p51
  $region11: #{unet_layer_down.6} parent=0 // pred_check_branch
    %54 = sbr.rel (%p52) target = $region13
  $region12: #{unet_layer_down.6} parent=0 // pred_region
    %55 = vst [vmem:[%s3] sm:$0xff] 0.0
    %56 = vst [vmem:[%s4] sm:$0xff] 0.0
  $region13: #{unet_layer_down.6} parent=0 // pred_fallthru
    _
  %v57 = vld [vmem:[%s39] sm:$0xf]
  %v58 = vld [vmem:[%s39 + $0x4] sm:$0xf]
  %v59 = vld [vmem:[%s39 + $0x8] sm:$0xf]
  %v60 = vld [vmem:[%s39 + $0xc] sm:$0xf]
  %v61 = vld [vmem:[%s39 + $0x10] sm:$0xf]
  %v62 = vld [vmem:[%s39 + $0x14] sm:$0xf]
  %v63 = vld [vmem:[%s39 + $0x18] sm:$0xf]
  %v64 = vld [vmem:[%s39 + $0x1c] sm:$0xf]
  %v65 = vld [vmem:[%s39 + $0x20] sm:$0xf]
  %v66 = vld [vmem:[%s39 + $0x24] sm:$0xf]
  %v67 = vld [vmem:[%s39 + $0x28] sm:$0xf]
  %v68 = vld [vmem:[%s39 + $0x2c] sm:$0xf]
  %v69 = vld [vmem:[%s39 + $0x30] sm:$0xf]
  %v70 = vld [vmem:[%s39 + $0x34] sm:$0xf]
  %v71 = vld [vmem:[%s39 + $0x38] sm:$0xf]
  %v72 = vld [vmem:[%s39 + $0x3c] sm:$0xf]
  %v73 = vld [vmem:[%s1] sm:$0xf]
  %v74 = vld [vmem:[%s1 + $0x4] sm:$0xf]
  %v75 = vld [vmem:[%s1 + $0x8] sm:$0xf]
  %v76 = vld [vmem:[%s1 + $0xc] sm:$0xf]
  %v77 = vld [vmem:[%s1 + $0x10] sm:$0xf]
  %v78 = vld [vmem:[%s1 + $0x14] sm:$0xf]
  %v79 = vld [vmem:[%s1 + $0x18] sm:$0xf]
  %v80 = vld [vmem:[%s1 + $0x1c] sm:$0xf]
  %v97 = vunpack.c.l.b16 %v57
  %v98 = vunpack.c.l.b16 %v58
  %v99 = vunpack.c.l.b16 %v59
  %v100 = vunpack.c.l.b16 %v60
  %v101 = vunpack.c.l.b16 %v61
  %v102 = vunpack.c.l.b16 %v62
  %v103 = vunpack.c.l.b16 %v63
  %v104 = vunpack.c.l.b16 %v64
  %v105 = vunpack.c.l.b16 %v65
  %v106 = vunpack.c.l.b16 %v66
  %v107 = vunpack.c.l.b16 %v67
  %v108 = vunpack.c.l.b16 %v68
  %v109 = vunpack.c.l.b16 %v69
  %v110 = vunpack.c.l.b16 %v70
  %v111 = vunpack.c.l.b16 %v71
  %v112 = vunpack.c.l.b16 %v72
  %v113 = vpack.c.b16 %v98, %v97
  %v114 = vpack.c.b16 %v100, %v99
  %v115 = vpack.c.b16 %v102, %v101
  %v116 = vpack.c.b16 %v104, %v103
  %v117 = vpack.c.b16 %v106, %v105
  %v118 = vpack.c.b16 %v108, %v107
  %v119 = vpack.c.b16 %v110, %v109
  %v120 = vpack.c.b16 %v112, %v111
  %v129 = vunpack.c.l.b16 %v73
  %v130 = vunpack.c.l.b16 %v74
  %v131 = vunpack.c.l.b16 %v75
  %v132 = vunpack.c.l.b16 %v76
  %v133 = vunpack.c.l.b16 %v77
  %v134 = vunpack.c.l.b16 %v78
  %v135 = vunpack.c.l.b16 %v79
  %v136 = vunpack.c.l.b16 %v80
  %v137 = vpack.c.b16 %v130, %v129
  %v138 = vpack.c.b16 %v132, %v131
  %v139 = vpack.c.b16 %v134, %v133
  %v140 = vpack.c.b16 %v136, %v135
  %vm145 = vcmask 523264
  %v147 = vsel %vm145, %v113, 0
  %v150 = vsel %vm145, %v114, 0
  %v153 = vsel %vm145, %v115, 0
  %v156 = vsel %vm145, %v116, 0
  %v159 = vsel %vm145, %v117, 0
  %v162 = vsel %vm145, %v118, 0
  %v165 = vsel %vm145, %v119, 0
  %v168 = vsel %vm145, %v120, 0
  %170 = vmatprep.subr.bf16.mxu0 0
  %171 = vmatpush1.bf16.msra.mxu0 0
  %172 = vmatprep.subr.bf16.mxu0 0
  %173 = vmatpush1.bf16.msra.mxu0 0
  %174 = vmatprep.subr.bf16.mxu0 0
  %175 = vmatpush1.bf16.msra.mxu0 0
  %176 = vmatprep.subr.bf16.mxu0 0
  %177 = vmatpush1.bf16.msra.mxu0 0
  %178 = vmatprep.subr.bf16.mxu0 0
  %179 = vmatpush1.bf16.msra.mxu0 %v140
  %180 = vmatprep.subr.bf16.mxu0 0
  %181 = vmatpush1.bf16.msra.mxu0 %v139
  %182 = vmatprep.subr.bf16.mxu0 0
  %183 = vmatpush1.bf16.msra.mxu0 %v138
  %184 = vmatprep.subr.bf16.mxu0 0
  %185 = vmatpush1.bf16.msra.mxu0 %v137
  %186 = vmatprep.subr.bf16.mxu0 0
  %187 = vmatpush2.bf16.msra.mxu0 0
  %188 = vmatprep.subr.bf16.mxu0 0
  %189 = vmatpush2.bf16.msra.mxu0 0
  %190 = vmatprep.subr.bf16.mxu0 0
  %191 = vmatpush2.bf16.msra.mxu0 0
  %192 = vmatprep.subr.bf16.mxu0 0
  %193 = vmatpush2.bf16.msra.mxu0 0
  %194 = vmatprep.subr.bf16.mxu0 0
  %195 = vmatpush2.bf16.msra.mxu0 0
  %196 = vmatprep.subr.bf16.mxu0 0
  %197 = vmatpush2.bf16.msra.mxu0 0
  %198 = vmatprep.subr.bf16.mxu0 0
  %199 = vmatpush2.bf16.msra.mxu0 0
  %200 = vmatprep.subr.bf16.mxu0 0
  %201 = vmatpush2.bf16.msra.mxu0 0
  %202 = vmatprep.mubr.bf16.mxu0 0
  %203 = vmatmul.mubr.bf16.gmra.mxu0 %v147
  %v204 = vpop.f32.mrf.mxu0
  %v205 = vadd.f32 0.0, %v204
  %v206 = vpop.f32.mrf.mxu0
  %v207 = vpop.f32.mrf.mxu0
  %v208 = vadd.f32 0.0, %v207
  %v209 = vpop.f32.mrf.mxu0
  %210 = vmatprep.mubr.bf16.mxu0 0
  %211 = vmatmul.mubr.bf16.gmra.mxu0 %v150
  %v212 = vpop.f32.mrf.mxu0
  %v213 = vadd.f32 0.0, %v212
  %v214 = vpop.f32.mrf.mxu0
  %v215 = vpop.f32.mrf.mxu0
  %v216 = vadd.f32 0.0, %v215
  %v217 = vpop.f32.mrf.mxu0
  %218 = vmatprep.mubr.bf16.mxu0 0
  %219 = vmatmul.mubr.bf16.gmra.mxu0 %v153
  %v220 = vpop.f32.mrf.mxu0
  %v221 = vadd.f32 0.0, %v220
  %v222 = vpop.f32.mrf.mxu0
  %v223 = vpop.f32.mrf.mxu0
  %v224 = vadd.f32 0.0, %v223
  %v225 = vpop.f32.mrf.mxu0
  %226 = vmatprep.mubr.bf16.mxu0 0
  %227 = vmatmul.mubr.bf16.gmra.mxu0 %v156
  %v228 = vpop.f32.mrf.mxu0
  %v229 = vadd.f32 0.0, %v228
  %v230 = vpop.f32.mrf.mxu0
  %v231 = vpop.f32.mrf.mxu0
  %v232 = vadd.f32 0.0, %v231
  %v233 = vpop.f32.mrf.mxu0
  %234 = vmatprep.mubr.bf16.mxu0 0
  %235 = vmatmul.mubr.bf16.gmra.mxu0 %v159
  %v236 = vpop.f32.mrf.mxu0
  %v237 = vadd.f32 0.0, %v236
  %v238 = vpop.f32.mrf.mxu0
  %v239 = vpop.f32.mrf.mxu0
  %v240 = vadd.f32 0.0, %v239
  %v241 = vpop.f32.mrf.mxu0
  %242 = vmatprep.mubr.bf16.mxu0 0
  %243 = vmatmul.mubr.bf16.gmra.mxu0 %v162
  %v244 = vpop.f32.mrf.mxu0
  %v245 = vadd.f32 0.0, %v244
  %v246 = vpop.f32.mrf.mxu0
  %v247 = vpop.f32.mrf.mxu0
  %v248 = vadd.f32 0.0, %v247
  %v249 = vpop.f32.mrf.mxu0
  %250 = vmatprep.mubr.bf16.mxu0 0
  %251 = vmatmul.mubr.bf16.gmra.mxu0 %v165
  %v252 = vpop.f32.mrf.mxu0
  %v253 = vadd.f32 0.0, %v252
  %v254 = vpop.f32.mrf.mxu0
  %v255 = vpop.f32.mrf.mxu0
  %v256 = vadd.f32 0.0, %v255
  %v257 = vpop.f32.mrf.mxu0
  %258 = vmatprep.mubr.bf16.mxu0 0
  %259 = vmatmul.mubr.bf16.gmra.mxu0 %v168
  %v260 = vpop.f32.mrf.mxu0
  %v261 = vadd.f32 0.0, %v260
  %v262 = vpop.f32.mrf.mxu0
  %v263 = vpop.f32.mrf.mxu0
  %v264 = vadd.f32 0.0, %v263
  %v265 = vpop.f32.mrf.mxu0
  %266 = vdwg.mxu0
  %v267 = vld [vmem:[%s3] sm:$0xff]
  %v268 = vadd.f32 %v205, %v208
  %v269 = vadd.f32 %v268, %v213
  %v270 = vadd.f32 %v269, %v216
  %v271 = vadd.f32 %v270, %v221
  %v272 = vadd.f32 %v271, %v224
  %v273 = vadd.f32 %v272, %v229
  %v274 = vadd.f32 %v273, %v232
  %v275 = vadd.f32 %v274, %v237
  %v276 = vadd.f32 %v275, %v240
  %v277 = vadd.f32 %v276, %v245
  %v278 = vadd.f32 %v277, %v248
  %v279 = vadd.f32 %v278, %v253
  %v280 = vadd.f32 %v279, %v256
  %v281 = vadd.f32 %v280, %v261
  %v282 = vadd.f32 %v281, %v264
  %v283 = vadd.f32 %v267, %v282
  %284 = vst [vmem:[%s3] sm:$0xff] %v283
  %v285 = vld [vmem:[%s4] sm:$0xff]
  %v286 = vmul.f32 %v205, %v205
  %v287 = vmul.f32 %v208, %v208
  %v288 = vmul.f32 %v213, %v213
  %v289 = vmul.f32 %v216, %v216
  %v290 = vmul.f32 %v221, %v221
  %v291 = vmul.f32 %v224, %v224
  %v292 = vmul.f32 %v229, %v229
  %v293 = vmul.f32 %v232, %v232
  %v294 = vmul.f32 %v237, %v237
  %v295 = vmul.f32 %v240, %v240
  %v296 = vmul.f32 %v245, %v245
  %v297 = vmul.f32 %v248, %v248
  %v298 = vmul.f32 %v253, %v253
  %v299 = vmul.f32 %v256, %v256
  %v300 = vmul.f32 %v261, %v261
  %v301 = vmul.f32 %v264, %v264
  %v302 = vadd.f32 %v286, %v287
  %v303 = vadd.f32 %v302, %v288
  %v304 = vadd.f32 %v303, %v289
  %v305 = vadd.f32 %v304, %v290
  %v306 = vadd.f32 %v305, %v291
  %v307 = vadd.f32 %v306, %v292
  %v308 = vadd.f32 %v307, %v293
  %v309 = vadd.f32 %v308, %v294
  %v310 = vadd.f32 %v309, %v295
  %v311 = vadd.f32 %v310, %v296
  %v312 = vadd.f32 %v311, %v297
  %v313 = vadd.f32 %v312, %v298
  %v314 = vadd.f32 %v313, %v299
  %v315 = vadd.f32 %v314, %v300
  %v316 = vadd.f32 %v315, %v301
  %v317 = vadd.f32 %v285, %v316
  %318 = vst [vmem:[%s4] sm:$0xff] %v317
  %v319 = vpack.c.bf16 %v208, %v205
  %v320 = vpack.c.bf16 %v216, %v213
  %v321 = vpack.c.bf16 %v224, %v221
  %v322 = vpack.c.bf16 %v232, %v229
  %v323 = vpack.c.bf16 %v240, %v237
  %v324 = vpack.c.bf16 %v248, %v245
  %v325 = vpack.c.bf16 %v256, %v253
  %v326 = vpack.c.bf16 %v264, %v261
  %v335 = vunpack.c.l.b16 %v319
  %v336 = vunpack.c.h.b16 %v319
  %v337 = vunpack.c.l.b16 %v320
  %v338 = vunpack.c.h.b16 %v320
  %v339 = vunpack.c.l.b16 %v321
  %v340 = vunpack.c.h.b16 %v321
  %v341 = vunpack.c.l.b16 %v322
  %v342 = vunpack.c.h.b16 %v322
  %v343 = vunpack.c.l.b16 %v323
  %v344 = vunpack.c.h.b16 %v323
  %v345 = vunpack.c.l.b16 %v324
  %v346 = vunpack.c.h.b16 %v324
  %v347 = vunpack.c.l.b16 %v325
  %v348 = vunpack.c.h.b16 %v325
  %v349 = vunpack.c.l.b16 %v326
  %v350 = vunpack.c.h.b16 %v326
  %v351 = vpack.c.b16 %v335, %v335
  %v352 = vpack.c.b16 %v336, %v336
  %v353 = vpack.c.b16 %v337, %v337
  %v354 = vpack.c.b16 %v338, %v338
  %v355 = vpack.c.b16 %v339, %v339
  %v356 = vpack.c.b16 %v340, %v340
  %v357 = vpack.c.b16 %v341, %v341
  %v358 = vpack.c.b16 %v342, %v342
  %v359 = vpack.c.b16 %v343, %v343
  %v360 = vpack.c.b16 %v344, %v344
  %v361 = vpack.c.b16 %v345, %v345
  %v362 = vpack.c.b16 %v346, %v346
  %v363 = vpack.c.b16 %v347, %v347
  %v364 = vpack.c.b16 %v348, %v348
  %v365 = vpack.c.b16 %v349, %v349
  %v366 = vpack.c.b16 %v350, %v350
  %383 = vst [vmem:[%s47] sm:$0xf] %v351
  %384 = vst [vmem:[%s47 + $0x4] sm:$0xf] %v352
  %385 = vst [vmem:[%s47 + $0x8] sm:$0xf] %v353
  %386 = vst [vmem:[%s47 + $0xc] sm:$0xf] %v354
  %387 = vst [vmem:[%s47 + $0x10] sm:$0xf] %v355
  %388 = vst [vmem:[%s47 + $0x14] sm:$0xf] %v356
  %389 = vst [vmem:[%s47 + $0x18] sm:$0xf] %v357
  %390 = vst [vmem:[%s47 + $0x1c] sm:$0xf] %v358
  %391 = vst [vmem:[%s47 + $0x20] sm:$0xf] %v359
  %392 = vst [vmem:[%s47 + $0x24] sm:$0xf] %v360
  %393 = vst [vmem:[%s47 + $0x28] sm:$0xf] %v361
  %394 = vst [vmem:[%s47 + $0x2c] sm:$0xf] %v362
  %395 = vst [vmem:[%s47 + $0x30] sm:$0xf] %v363
  %396 = vst [vmem:[%s47 + $0x34] sm:$0xf] %v364
  %397 = vst [vmem:[%s47 + $0x38] sm:$0xf] %v365
  %398 = vst [vmem:[%s47 + $0x3c] sm:$0xf] %v366
  %s399 = sadd.s32 0, 0
  %s400 = smul.u32 16, %s399
  %p401 = scmp.lt.s32.totalorder %s400, 15
  %s402 = scalar_select %p401, %s400, 15
  %s403 = smul.addr %s402, 4
  %s404 = scalar_lea.vmem %s2, %s403
  // Predicated region
  $region14: #{unet_layer_down.6} parent=0 // pred_check
    _
  $region15: #{unet_layer_down.6} parent=0 // pred_check_branch
    %406 = sbr.rel (0) target = $region17
  $region16: #{unet_layer_down.6} parent=0 // pred_region
    %s407 = sadd.s32 0, 0
    %s408 = smul.u32 16, %s407
  $region17: #{unet_layer_down.6} parent=0 // pred_fallthru
    _
  // Predicated region
  $region18: #{unet_layer_down.6} parent=0 // pred_check
    _
  $region19: #{unet_layer_down.6} parent=0 // pred_check_branch
    %410 = sbr.rel (0) target = $region21
  $region20: #{unet_layer_down.6} parent=0 // pred_region
    _
  $region21: #{unet_layer_down.6} parent=0 // pred_fallthru
    _
  // Predicated region
  $region22: #{unet_layer_down.6} parent=0 // pred_check
    _
  $region23: #{unet_layer_down.6} parent=0 // pred_check_branch
    %412 = sbr.rel (0) target = $region25
  $region24: #{unet_layer_down.6} parent=0 // pred_region
    _
  $region25: #{unet_layer_down.6} parent=0 // pred_fallthru
    _
  // Predicated region
  $region26: #{unet_layer_down.6} parent=0 // pred_check
    _
  $region27: #{unet_layer_down.6} parent=0 // pred_check_branch
    %414 = sbr.rel (0) target = $region29
  $region28: #{unet_layer_down.6} parent=0 // pred_region
    %s415 = sadd.s32 0, 0
    %s416 = smul.u32 16, %s415
    %p417 = scmp.lt.s32.totalorder %s416, 15
    %s418 = scalar_select %p417, %s416, 15
    %s419 = smul.addr %s418, 4
    %s420 = scalar_lea.vmem %s2, %s419
  $region29: #{unet_layer_down.6} parent=0 // pred_fallthru
    _
  // Predicated region
  $region30: #{unet_layer_down.6} parent=0 // pred_check
    _
  $region31: #{unet_layer_down.6} parent=0 // pred_check_branch
    %422 = sbr.rel (0) target = $region33
  $region32: #{unet_layer_down.6} parent=0 // pred_region
    _
  $region33: #{unet_layer_down.6} parent=0 // pred_fallthru
    _
  // Predicated region
  $region34: #{unet_layer_down.6} parent=0 // pred_check
    _
  $region35: #{unet_layer_down.6} parent=0 // pred_check_branch
    %424 = sbr.rel (0) target = $region37
  $region36: #{unet_layer_down.6} parent=0 // pred_region
    _
  $region37: #{unet_layer_down.6} parent=0 // pred_fallthru
    _

// kernel: unet_layer_down.11
$region0: #{unet_layer_down.11}
  #allocation0 [shape = 'u32[]', space=smem, size = 0x4, offset = 0x4, fixed_abs, tag = 'smem constant byte address 0x4 - core index']
  #allocation1 [shape = 'u32[144,128]{1,0:T(1,128)}', space=vmem, size = 0x12000, scoped, tag = 'internal scratch']
  %s0 = inlined_call_operand.vmem [shape: bf16[128,128], index: 0, kind: input, shape index: {}]
  %s1 = inlined_call_operand.vmem [shape: f32[1,128], index: 1, kind: input, shape index: {}]
  %s2 = inlined_call_operand.vmem [shape: f32[1,128], index: 2, kind: input, shape index: {}]
  %s3 = inlined_call_operand.vmem [shape: f32[128,128], index: 3, kind: output, shape index: {}]
  %s4 = sld [smem:[#allocation0]]
  $region22: #{unet_layer_down.11} parent=0
    _
  %s6 = ssub.s32 1, %s4
  %s7 = scalar_select 0, %s6, %s4
  // Predicated region
  $region2: #{unet_layer_down.11} parent=0 // pred_check
    _
  $region3: #{unet_layer_down.11} parent=0 // pred_check_branch
    %9 = sbr.rel (0) target = $region5
  $region4: #{unet_layer_down.11} parent=0 // pred_region
    _
  $region5: #{unet_layer_down.11} parent=0 // pred_fallthru
    _
  // Predicated region
  $region6: #{unet_layer_down.11} parent=0 // pred_check
    _
  $region7: #{unet_layer_down.11} parent=0 // pred_check_branch
    %11 = sbr.rel (0) target = $region9
  $region8: #{unet_layer_down.11} parent=0 // pred_region
    _
  $region9: #{unet_layer_down.11} parent=0 // pred_fallthru
    _
  // Predicated region
  $region10: #{unet_layer_down.11} parent=0 // pred_check
    _
  $region11: #{unet_layer_down.11} parent=0 // pred_check_branch
    %13 = sbr.rel (0) target = $region13
  $region12: #{unet_layer_down.11} parent=0 // pred_region
    _
  $region13: #{unet_layer_down.11} parent=0 // pred_fallthru
    _
  %v14 = vld [vmem:[%s0] sm:$0xf]
  %v15 = vld [vmem:[%s0 + $0x4] sm:$0xf]
  %v16 = vld [vmem:[%s0 + $0x8] sm:$0xf]
  %v17 = vld [vmem:[%s0 + $0xc] sm:$0xf]
  %v18 = vld [vmem:[%s0 + $0x10] sm:$0xf]
  %v19 = vld [vmem:[%s0 + $0x14] sm:$0xf]
  %v20 = vld [vmem:[%s0 + $0x18] sm:$0xf]
  %v21 = vld [vmem:[%s0 + $0x1c] sm:$0xf]
  %v22 = vld [vmem:[%s0 + $0x20] sm:$0xf]
  %v23 = vld [vmem:[%s0 + $0x24] sm:$0xf]
  %v24 = vld [vmem:[%s0 + $0x28] sm:$0xf]
  %v25 = vld [vmem:[%s0 + $0x2c] sm:$0xf]
  %v26 = vld [vmem:[%s0 + $0x30] sm:$0xf]
  %v27 = vld [vmem:[%s0 + $0x34] sm:$0xf]
  %v28 = vld [vmem:[%s0 + $0x38] sm:$0xf]
  %v29 = vld [vmem:[%s0 + $0x3c] sm:$0xf]
  %v30 = vunpack.c.l.bf16 %v14
  %v31 = vunpack.c.l.bf16 %v15
  %v32 = vunpack.c.l.bf16 %v16
  %v33 = vunpack.c.l.bf16 %v17
  %v34 = vunpack.c.l.bf16 %v18
  %v35 = vunpack.c.l.bf16 %v19
  %v36 = vunpack.c.l.bf16 %v20
  %v37 = vunpack.c.l.bf16 %v21
  %v38 = vunpack.c.l.bf16 %v22
  %v39 = vunpack.c.l.bf16 %v23
  %v40 = vunpack.c.l.bf16 %v24
  %v41 = vunpack.c.l.bf16 %v25
  %v42 = vunpack.c.l.bf16 %v26
  %v43 = vunpack.c.l.bf16 %v27
  %v44 = vunpack.c.l.bf16 %v28
  %v45 = vunpack.c.l.bf16 %v29
  %v46 = vld [vmem:[%s1] sm:$0x1]
  %v48 = vlaneseq
  %v49 = vshrl.u32 %v48, 7
  %v50 = vsub.s32 0, %v49
  %v51 = vrot.slane %v46, %v50
  %v53 = vmul.f32 %v30, %v51
  %v54 = vmul.f32 %v31, %v51
  %v55 = vmul.f32 %v32, %v51
  %v56 = vmul.f32 %v33, %v51
  %v57 = vmul.f32 %v34, %v51
  %v58 = vmul.f32 %v35, %v51
  %v59 = vmul.f32 %v36, %v51
  %v60 = vmul.f32 %v37, %v51
  %v61 = vmul.f32 %v38, %v51
  %v62 = vmul.f32 %v39, %v51
  %v63 = vmul.f32 %v40, %v51
  %v64 = vmul.f32 %v41, %v51
  %v65 = vmul.f32 %v42, %v51
  %v66 = vmul.f32 %v43, %v51
  %v67 = vmul.f32 %v44, %v51
  %v68 = vmul.f32 %v45, %v51
  %v69 = vld [vmem:[%s2] sm:$0x1]
  %v71 = vlaneseq
  %v72 = vshrl.u32 %v71, 7
  %v73 = vsub.s32 0, %v72
  %v74 = vrot.slane %v69, %v73
  %v76 = vadd.f32 %v53, %v74
  %v77 = vadd.f32 %v54, %v74
  %v78 = vadd.f32 %v55, %v74
  %v79 = vadd.f32 %v56, %v74
  %v80 = vadd.f32 %v57, %v74
  %v81 = vadd.f32 %v58, %v74
  %v82 = vadd.f32 %v59, %v74
  %v83 = vadd.f32 %v60, %v74
  %v84 = vadd.f32 %v61, %v74
  %v85 = vadd.f32 %v62, %v74
  %v86 = vadd.f32 %v63, %v74
  %v87 = vadd.f32 %v64, %v74
  %v88 = vadd.f32 %v65, %v74
  %v89 = vadd.f32 %v66, %v74
  %v90 = vadd.f32 %v67, %v74
  %v91 = vadd.f32 %v68, %v74
  %v92 = vmax.f32 %v76, 0.0
  %v93 = vmax.f32 %v77, 0.0
  %v94 = vmax.f32 %v78, 0.0
  %v95 = vmax.f32 %v79, 0.0
  %v96 = vmax.f32 %v80, 0.0
  %v97 = vmax.f32 %v81, 0.0
  %v98 = vmax.f32 %v82, 0.0
  %v99 = vmax.f32 %v83, 0.0
  %v100 = vmax.f32 %v84, 0.0
  %v101 = vmax.f32 %v85, 0.0
  %v102 = vmax.f32 %v86, 0.0
  %v103 = vmax.f32 %v87, 0.0
  %v104 = vmax.f32 %v88, 0.0
  %v105 = vmax.f32 %v89, 0.0
  %v106 = vmax.f32 %v90, 0.0
  %v107 = vmax.f32 %v91, 0.0
  %108 = vst [vmem:[%s3] sm:$0xff] %v92
  %109 = vst [vmem:[%s3 + $0x8] sm:$0xff] %v93
  %110 = vst [vmem:[%s3 + $0x10] sm:$0xff] %v94
  %111 = vst [vmem:[%s3 + $0x18] sm:$0xff] %v95
  %112 = vst [vmem:[%s3 + $0x20] sm:$0xff] %v96
  %113 = vst [vmem:[%s3 + $0x28] sm:$0xff] %v97
  %114 = vst [vmem:[%s3 + $0x30] sm:$0xff] %v98
  %115 = vst [vmem:[%s3 + $0x38] sm:$0xff] %v99
  %116 = vst [vmem:[%s3 + $0x40] sm:$0xff] %v100
  %117 = vst [vmem:[%s3 + $0x48] sm:$0xff] %v101
  %118 = vst [vmem:[%s3 + $0x50] sm:$0xff] %v102
  %119 = vst [vmem:[%s3 + $0x58] sm:$0xff] %v103
  %120 = vst [vmem:[%s3 + $0x60] sm:$0xff] %v104
  %121 = vst [vmem:[%s3 + $0x68] sm:$0xff] %v105
  %122 = vst [vmem:[%s3 + $0x70] sm:$0xff] %v106
  %123 = vst [vmem:[%s3 + $0x78] sm:$0xff] %v107
  // Predicated region
  $region14: #{unet_layer_down.11} parent=0 // pred_check
    _
  $region15: #{unet_layer_down.11} parent=0 // pred_check_branch
    %125 = sbr.rel (0) target = $region17
  $region16: #{unet_layer_down.11} parent=0 // pred_region
    _
  $region17: #{unet_layer_down.11} parent=0 // pred_fallthru
    _
  // Predicated region
  $region18: #{unet_layer_down.11} parent=0 // pred_check
    _
  $region19: #{unet_layer_down.11} parent=0 // pred_check_branch
    %127 = sbr.rel (0) target = $region21
  $region20: #{unet_layer_down.11} parent=0 // pred_region
    _
  $region21: #{unet_layer_down.11} parent=0 // pred_fallthru
    _

// kernel: unet_layer_down.8
$region0: #{unet_layer_down.8}
  #allocation0 [shape = 'u32[]', space=smem, size = 0x4, offset = 0x4, fixed_abs, tag = 'smem constant byte address 0x4 - core index']
  #allocation1 [shape = 'u32[144,128]{1,0:T(1,128)}', space=vmem, size = 0x12000, scoped, tag = 'internal scratch']
  %s0 = inlined_call_operand.vmem [shape: bf16[128,72], index: 0, kind: input, shape index: {}]
  %s1 = inlined_call_operand.vmem [shape: bf16[72,128], index: 1, kind: input, shape index: {}]
  %s2 = inlined_call_operand.vmem [shape: bf16[128,128], index: 2, kind: output, shape index: {0}]
  %s3 = inlined_call_operand.vmem [shape: f32[8,128], index: 3, kind: output, shape index: {1}]
  %s4 = inlined_call_operand.vmem [shape: f32[8,128], index: 4, kind: output, shape index: {2}]
  %5 = xla_tuple %s2, %s3, %s4
  %s6 = sld [smem:[#allocation0]]
  $region38: #{unet_layer_down.8} parent=0
    _
  %s8 = ssub.s32 1, %s6
  %s9 = scalar_select 0, %s8, %s6
  // Predicated region
  $region2: #{unet_layer_down.8} parent=0 // pred_check
    _
  $region3: #{unet_layer_down.8} parent=0 // pred_check_branch
    %11 = sbr.rel (0) target = $region5
  $region4: #{unet_layer_down.8} parent=0 // pred_region
    %s12 = sadd.s32 0, 0
    %s13 = smul.u32 16, %s12
    %p14 = scmp.lt.s32.totalorder %s13, 15
    %s15 = scalar_select %p14, %s13, 15
    %s16 = smul.addr %s15, 4
    %s17 = scalar_lea.vmem %s0, %s16
    %s18 = sadd.s32 0, 0
    %s19 = smul.u32 16, %s18
  $region5: #{unet_layer_down.8} parent=0 // pred_fallthru
    _
  // Predicated region
  $region6: #{unet_layer_down.8} parent=0 // pred_check
    _
  $region7: #{unet_layer_down.8} parent=0 // pred_check_branch
    %21 = sbr.rel (0) target = $region9
  $region8: #{unet_layer_down.8} parent=0 // pred_region
    _
  $region9: #{unet_layer_down.8} parent=0 // pred_fallthru
    _
  %s22 = sadd.s32 0, 0
  %s23 = smul.u32 16, %s22
  %p24 = scmp.lt.s32.totalorder %s23, 15
  %s25 = scalar_select %p24, %s23, 15
  %s26 = smul.addr %s25, 4
  %s27 = scalar_lea.vmem %s0, %s26
  %s28 = sadd.s32 0, 0
  %s29 = smul.u32 16, %s28
  %p30 = scmp.lt.s32.totalorder %s29, 15
  %s31 = scalar_select %p30, %s29, 15
  %s32 = smul.addr %s31, 4
  %s33 = scalar_lea.vmem %s2, %s32
  %s34 = sadd.s32 0, 0
  %s35 = smul.u32 16, %s34
  %p36 = scmp.lt.s32.totalorder %s35, 15
  %s37 = scalar_select %p36, %s35, 15
  %s38 = smul.addr %s37, 4
  %s39 = scalar_lea.vmem %s0, %s38
  %s40 = sadd.s32 0, 0
  %s41 = smul.u32 16, %s40
  %s42 = sadd.s32 0, 0
  %s43 = smul.u32 16, %s42
  %p44 = scmp.lt.s32.totalorder %s43, 15
  %s45 = scalar_select %p44, %s43, 15
  %s46 = smul.addr %s45, 4
  %s47 = scalar_lea.vmem %s2, %s46
  %s48 = sadd.s32 0, 0
  %s49 = smul.u32 16, %s48
  %p51 = scmp.eq.s32.totalorder 0, 0
  // Predicated region
  $region10: #{unet_layer_down.8} parent=0 // pred_check
    %p52 = pneg %p51
  $region11: #{unet_layer_down.8} parent=0 // pred_check_branch
    %54 = sbr.rel (%p52) target = $region13
  $region12: #{unet_layer_down.8} parent=0 // pred_region
    %55 = vst [vmem:[%s3] sm:$0xff] 0.0
    %56 = vst [vmem:[%s4] sm:$0xff] 0.0
  $region13: #{unet_layer_down.8} parent=0 // pred_fallthru
    _
  %v57 = vld [vmem:[%s39] sm:$0xf]
  %v58 = vld [vmem:[%s39 + $0x4] sm:$0xf]
  %v59 = vld [vmem:[%s39 + $0x8] sm:$0xf]
  %v60 = vld [vmem:[%s39 + $0xc] sm:$0xf]
  %v61 = vld [vmem:[%s39 + $0x10] sm:$0xf]
  %v62 = vld [vmem:[%s39 + $0x14] sm:$0xf]
  %v63 = vld [vmem:[%s39 + $0x18] sm:$0xf]
  %v64 = vld [vmem:[%s39 + $0x1c] sm:$0xf]
  %v65 = vld [vmem:[%s39 + $0x20] sm:$0xf]
  %v66 = vld [vmem:[%s39 + $0x24] sm:$0xf]
  %v67 = vld [vmem:[%s39 + $0x28] sm:$0xf]
  %v68 = vld [vmem:[%s39 + $0x2c] sm:$0xf]
  %v69 = vld [vmem:[%s39 + $0x30] sm:$0xf]
  %v70 = vld [vmem:[%s39 + $0x34] sm:$0xf]
  %v71 = vld [vmem:[%s39 + $0x38] sm:$0xf]
  %v72 = vld [vmem:[%s39 + $0x3c] sm:$0xf]
  %v73 = vld [vmem:[%s1] sm:$0xf]
  %v74 = vld [vmem:[%s1 + $0x4] sm:$0xf]
  %v75 = vld [vmem:[%s1 + $0x8] sm:$0xf]
  %v76 = vld [vmem:[%s1 + $0xc] sm:$0xf]
  %v77 = vld [vmem:[%s1 + $0x10] sm:$0xf]
  %v78 = vld [vmem:[%s1 + $0x14] sm:$0xf]
  %v79 = vld [vmem:[%s1 + $0x18] sm:$0xf]
  %v80 = vld [vmem:[%s1 + $0x1c] sm:$0xf]
  %v81 = vld [vmem:[%s1 + $0x20] sm:$0xf]
  %v98 = vunpack.c.l.b16 %v57
  %v99 = vunpack.c.l.b16 %v58
  %v100 = vunpack.c.l.b16 %v59
  %v101 = vunpack.c.l.b16 %v60
  %v102 = vunpack.c.l.b16 %v61
  %v103 = vunpack.c.l.b16 %v62
  %v104 = vunpack.c.l.b16 %v63
  %v105 = vunpack.c.l.b16 %v64
  %v106 = vunpack.c.l.b16 %v65
  %v107 = vunpack.c.l.b16 %v66
  %v108 = vunpack.c.l.b16 %v67
  %v109 = vunpack.c.l.b16 %v68
  %v110 = vunpack.c.l.b16 %v69
  %v111 = vunpack.c.l.b16 %v70
  %v112 = vunpack.c.l.b16 %v71
  %v113 = vunpack.c.l.b16 %v72
  %v114 = vpack.c.b16 %v99, %v98
  %v115 = vpack.c.b16 %v101, %v100
  %v116 = vpack.c.b16 %v103, %v102
  %v117 = vpack.c.b16 %v105, %v104
  %v118 = vpack.c.b16 %v107, %v106
  %v119 = vpack.c.b16 %v109, %v108
  %v120 = vpack.c.b16 %v111, %v110
  %v121 = vpack.c.b16 %v113, %v112
  %v131 = vunpack.c.l.b16 %v73
  %v132 = vunpack.c.l.b16 %v74
  %v133 = vunpack.c.l.b16 %v75
  %v134 = vunpack.c.l.b16 %v76
  %v135 = vunpack.c.l.b16 %v77
  %v136 = vunpack.c.l.b16 %v78
  %v137 = vunpack.c.l.b16 %v79
  %v138 = vunpack.c.l.b16 %v80
  %v139 = vunpack.c.l.b16 %v81
  %v140 = vpack.c.b16 %v132, %v131
  %v141 = vpack.c.b16 %v134, %v133
  %v142 = vpack.c.b16 %v136, %v135
  %v143 = vpack.c.b16 %v138, %v137
  %v144 = vpack.c.b16 %v139, %v139
  %vm149 = vcmask 588800
  %v151 = vsel %vm149, %v114, 0
  %v154 = vsel %vm149, %v115, 0
  %v157 = vsel %vm149, %v116, 0
  %v160 = vsel %vm149, %v117, 0
  %v163 = vsel %vm149, %v118, 0
  %v166 = vsel %vm149, %v119, 0
  %v169 = vsel %vm149, %v120, 0
  %v172 = vsel %vm149, %v121, 0
  %vm174 = vcmask 1043456
  %v176 = vsel %vm174, %v144, 0
  %178 = vmatprep.subr.bf16.mxu0 0
  %179 = vmatpush1.bf16.msra.mxu0 0
  %180 = vmatprep.subr.bf16.mxu0 0
  %181 = vmatpush1.bf16.msra.mxu0 0
  %182 = vmatprep.subr.bf16.mxu0 0
  %183 = vmatpush1.bf16.msra.mxu0 0
  %184 = vmatprep.subr.bf16.mxu0 0
  %185 = vmatpush1.bf16.msra.mxu0 %v176
  %186 = vmatprep.subr.bf16.mxu0 0
  %187 = vmatpush1.bf16.msra.mxu0 %v143
  %188 = vmatprep.subr.bf16.mxu0 0
  %189 = vmatpush1.bf16.msra.mxu0 %v142
  %190 = vmatprep.subr.bf16.mxu0 0
  %191 = vmatpush1.bf16.msra.mxu0 %v141
  %192 = vmatprep.subr.bf16.mxu0 0
  %193 = vmatpush1.bf16.msra.mxu0 %v140
  %194 = vmatprep.subr.bf16.mxu0 0
  %195 = vmatpush2.bf16.msra.mxu0 0
  %196 = vmatprep.subr.bf16.mxu0 0
  %197 = vmatpush2.bf16.msra.mxu0 0
  %198 = vmatprep.subr.bf16.mxu0 0
  %199 = vmatpush2.bf16.msra.mxu0 0
  %200 = vmatprep.subr.bf16.mxu0 0
  %201 = vmatpush2.bf16.msra.mxu0 0
  %202 = vmatprep.subr.bf16.mxu0 0
  %203 = vmatpush2.bf16.msra.mxu0 0
  %204 = vmatprep.subr.bf16.mxu0 0
  %205 = vmatpush2.bf16.msra.mxu0 0
  %206 = vmatprep.subr.bf16.mxu0 0
  %207 = vmatpush2.bf16.msra.mxu0 0
  %208 = vmatprep.subr.bf16.mxu0 0
  %209 = vmatpush2.bf16.msra.mxu0 0
  %210 = vmatprep.mubr.bf16.mxu0 0
  %211 = vmatmul.mubr.bf16.gmra.mxu0 %v151
  %v212 = vpop.f32.mrf.mxu0
  %v213 = vadd.f32 0.0, %v212
  %v214 = vpop.f32.mrf.mxu0
  %v215 = vpop.f32.mrf.mxu0
  %v216 = vadd.f32 0.0, %v215
  %v217 = vpop.f32.mrf.mxu0
  %218 = vmatprep.mubr.bf16.mxu0 0
  %219 = vmatmul.mubr.bf16.gmra.mxu0 %v154
  %v220 = vpop.f32.mrf.mxu0
  %v221 = vadd.f32 0.0, %v220
  %v222 = vpop.f32.mrf.mxu0
  %v223 = vpop.f32.mrf.mxu0
  %v224 = vadd.f32 0.0, %v223
  %v225 = vpop.f32.mrf.mxu0
  %226 = vmatprep.mubr.bf16.mxu0 0
  %227 = vmatmul.mubr.bf16.gmra.mxu0 %v157
  %v228 = vpop.f32.mrf.mxu0
  %v229 = vadd.f32 0.0, %v228
  %v230 = vpop.f32.mrf.mxu0
  %v231 = vpop.f32.mrf.mxu0
  %v232 = vadd.f32 0.0, %v231
  %v233 = vpop.f32.mrf.mxu0
  %234 = vmatprep.mubr.bf16.mxu0 0
  %235 = vmatmul.mubr.bf16.gmra.mxu0 %v160
  %v236 = vpop.f32.mrf.mxu0
  %v237 = vadd.f32 0.0, %v236
  %v238 = vpop.f32.mrf.mxu0
  %v239 = vpop.f32.mrf.mxu0
  %v240 = vadd.f32 0.0, %v239
  %v241 = vpop.f32.mrf.mxu0
  %242 = vmatprep.mubr.bf16.mxu0 0
  %243 = vmatmul.mubr.bf16.gmra.mxu0 %v163
  %v244 = vpop.f32.mrf.mxu0
  %v245 = vadd.f32 0.0, %v244
  %v246 = vpop.f32.mrf.mxu0
  %v247 = vpop.f32.mrf.mxu0
  %v248 = vadd.f32 0.0, %v247
  %v249 = vpop.f32.mrf.mxu0
  %250 = vmatprep.mubr.bf16.mxu0 0
  %251 = vmatmul.mubr.bf16.gmra.mxu0 %v166
  %v252 = vpop.f32.mrf.mxu0
  %v253 = vadd.f32 0.0, %v252
  %v254 = vpop.f32.mrf.mxu0
  %v255 = vpop.f32.mrf.mxu0
  %v256 = vadd.f32 0.0, %v255
  %v257 = vpop.f32.mrf.mxu0
  %258 = vmatprep.mubr.bf16.mxu0 0
  %259 = vmatmul.mubr.bf16.gmra.mxu0 %v169
  %v260 = vpop.f32.mrf.mxu0
  %v261 = vadd.f32 0.0, %v260
  %v262 = vpop.f32.mrf.mxu0
  %v263 = vpop.f32.mrf.mxu0
  %v264 = vadd.f32 0.0, %v263
  %v265 = vpop.f32.mrf.mxu0
  %266 = vmatprep.mubr.bf16.mxu0 0
  %267 = vmatmul.mubr.bf16.gmra.mxu0 %v172
  %v268 = vpop.f32.mrf.mxu0
  %v269 = vadd.f32 0.0, %v268
  %v270 = vpop.f32.mrf.mxu0
  %v271 = vpop.f32.mrf.mxu0
  %v272 = vadd.f32 0.0, %v271
  %v273 = vpop.f32.mrf.mxu0
  %274 = vdwg.mxu0
  %v275 = vld [vmem:[%s3] sm:$0xff]
  %v276 = vadd.f32 %v213, %v216
  %v277 = vadd.f32 %v276, %v221
  %v278 = vadd.f32 %v277, %v224
  %v279 = vadd.f32 %v278, %v229
  %v280 = vadd.f32 %v279, %v232
  %v281 = vadd.f32 %v280, %v237
  %v282 = vadd.f32 %v281, %v240
  %v283 = vadd.f32 %v282, %v245
  %v284 = vadd.f32 %v283, %v248
  %v285 = vadd.f32 %v284, %v253
  %v286 = vadd.f32 %v285, %v256
  %v287 = vadd.f32 %v286, %v261
  %v288 = vadd.f32 %v287, %v264
  %v289 = vadd.f32 %v288, %v269
  %v290 = vadd.f32 %v289, %v272
  %v291 = vadd.f32 %v275, %v290
  %292 = vst [vmem:[%s3] sm:$0xff] %v291
  %v293 = vld [vmem:[%s4] sm:$0xff]
  %v294 = vmul.f32 %v213, %v213
  %v295 = vmul.f32 %v216, %v216
  %v296 = vmul.f32 %v221, %v221
  %v297 = vmul.f32 %v224, %v224
  %v298 = vmul.f32 %v229, %v229
  %v299 = vmul.f32 %v232, %v232
  %v300 = vmul.f32 %v237, %v237
  %v301 = vmul.f32 %v240, %v240
  %v302 = vmul.f32 %v245, %v245
  %v303 = vmul.f32 %v248, %v248
  %v304 = vmul.f32 %v253, %v253
  %v305 = vmul.f32 %v256, %v256
  %v306 = vmul.f32 %v261, %v261
  %v307 = vmul.f32 %v264, %v264
  %v308 = vmul.f32 %v269, %v269
  %v309 = vmul.f32 %v272, %v272
  %v310 = vadd.f32 %v294, %v295
  %v311 = vadd.f32 %v310, %v296
  %v312 = vadd.f32 %v311, %v297
  %v313 = vadd.f32 %v312, %v298
  %v314 = vadd.f32 %v313, %v299
  %v315 = vadd.f32 %v314, %v300
  %v316 = vadd.f32 %v315, %v301
  %v317 = vadd.f32 %v316, %v302
  %v318 = vadd.f32 %v317, %v303
  %v319 = vadd.f32 %v318, %v304
  %v320 = vadd.f32 %v319, %v305
  %v321 = vadd.f32 %v320, %v306
  %v322 = vadd.f32 %v321, %v307
  %v323 = vadd.f32 %v322, %v308
  %v324 = vadd.f32 %v323, %v309
  %v325 = vadd.f32 %v293, %v324
  %326 = vst [vmem:[%s4] sm:$0xff] %v325
  %v327 = vpack.c.bf16 %v216, %v213
  %v328 = vpack.c.bf16 %v224, %v221
  %v329 = vpack.c.bf16 %v232, %v229
  %v330 = vpack.c.bf16 %v240, %v237
  %v331 = vpack.c.bf16 %v248, %v245
  %v332 = vpack.c.bf16 %v256, %v253
  %v333 = vpack.c.bf16 %v264, %v261
  %v334 = vpack.c.bf16 %v272, %v269
  %v343 = vunpack.c.l.b16 %v327
  %v344 = vunpack.c.h.b16 %v327
  %v345 = vunpack.c.l.b16 %v328
  %v346 = vunpack.c.h.b16 %v328
  %v347 = vunpack.c.l.b16 %v329
  %v348 = vunpack.c.h.b16 %v329
  %v349 = vunpack.c.l.b16 %v330
  %v350 = vunpack.c.h.b16 %v330
  %v351 = vunpack.c.l.b16 %v331
  %v352 = vunpack.c.h.b16 %v331
  %v353 = vunpack.c.l.b16 %v332
  %v354 = vunpack.c.h.b16 %v332
  %v355 = vunpack.c.l.b16 %v333
  %v356 = vunpack.c.h.b16 %v333
  %v357 = vunpack.c.l.b16 %v334
  %v358 = vunpack.c.h.b16 %v334
  %v359 = vpack.c.b16 %v343, %v343
  %v360 = vpack.c.b16 %v344, %v344
  %v361 = vpack.c.b16 %v345, %v345
  %v362 = vpack.c.b16 %v346, %v346
  %v363 = vpack.c.b16 %v347, %v347
  %v364 = vpack.c.b16 %v348, %v348
  %v365 = vpack.c.b16 %v349, %v349
  %v366 = vpack.c.b16 %v350, %v350
  %v367 = vpack.c.b16 %v351, %v351
  %v368 = vpack.c.b16 %v352, %v352
  %v369 = vpack.c.b16 %v353, %v353
  %v370 = vpack.c.b16 %v354, %v354
  %v371 = vpack.c.b16 %v355, %v355
  %v372 = vpack.c.b16 %v356, %v356
  %v373 = vpack.c.b16 %v357, %v357
  %v374 = vpack.c.b16 %v358, %v358
  %391 = vst [vmem:[%s47] sm:$0xf] %v359
  %392 = vst [vmem:[%s47 + $0x4] sm:$0xf] %v360
  %393 = vst [vmem:[%s47 + $0x8] sm:$0xf] %v361
  %394 = vst [vmem:[%s47 + $0xc] sm:$0xf] %v362
  %395 = vst [vmem:[%s47 + $0x10] sm:$0xf] %v363
  %396 = vst [vmem:[%s47 + $0x14] sm:$0xf] %v364
  %397 = vst [vmem:[%s47 + $0x18] sm:$0xf] %v365
  %398 = vst [vmem:[%s47 + $0x1c] sm:$0xf] %v366
  %399 = vst [vmem:[%s47 + $0x20] sm:$0xf] %v367
  %400 = vst [vmem:[%s47 + $0x24] sm:$0xf] %v368
  %401 = vst [vmem:[%s47 + $0x28] sm:$0xf] %v369
  %402 = vst [vmem:[%s47 + $0x2c] sm:$0xf] %v370
  %403 = vst [vmem:[%s47 + $0x30] sm:$0xf] %v371
  %404 = vst [vmem:[%s47 + $0x34] sm:$0xf] %v372
  %405 = vst [vmem:[%s47 + $0x38] sm:$0xf] %v373
  %406 = vst [vmem:[%s47 + $0x3c] sm:$0xf] %v374
  %s407 = sadd.s32 0, 0
  %s408 = smul.u32 16, %s407
  %p409 = scmp.lt.s32.totalorder %s408, 15
  %s410 = scalar_select %p409, %s408, 15
  %s411 = smul.addr %s410, 4
  %s412 = scalar_lea.vmem %s2, %s411
  // Predicated region
  $region14: #{unet_layer_down.8} parent=0 // pred_check
    _
  $region15: #{unet_layer_down.8} parent=0 // pred_check_branch
    %414 = sbr.rel (0) target = $region17
  $region16: #{unet_layer_down.8} parent=0 // pred_region
    %s415 = sadd.s32 0, 0
    %s416 = smul.u32 16, %s415
  $region17: #{unet_layer_down.8} parent=0 // pred_fallthru
    _
  // Predicated region
  $region18: #{unet_layer_down.8} parent=0 // pred_check
    _
  $region19: #{unet_layer_down.8} parent=0 // pred_check_branch
    %418 = sbr.rel (0) target = $region21
  $region20: #{unet_layer_down.8} parent=0 // pred_region
    _
  $region21: #{unet_layer_down.8} parent=0 // pred_fallthru
    _
  // Predicated region
  $region22: #{unet_layer_down.8} parent=0 // pred_check
    _
  $region23: #{unet_layer_down.8} parent=0 // pred_check_branch
    %420 = sbr.rel (0) target = $region25
  $region24: #{unet_layer_down.8} parent=0 // pred_region
    _
  $region25: #{unet_layer_down.8} parent=0 // pred_fallthru
    _
  // Predicated region
  $region26: #{unet_layer_down.8} parent=0 // pred_check
    _
  $region27: #{unet_layer_down.8} parent=0 // pred_check_branch
    %422 = sbr.rel (0) target = $region29
  $region28: #{unet_layer_down.8} parent=0 // pred_region
    %s423 = sadd.s32 0, 0
    %s424 = smul.u32 16, %s423
    %p425 = scmp.lt.s32.totalorder %s424, 15
    %s426 = scalar_select %p425, %s424, 15
    %s427 = smul.addr %s426, 4
    %s428 = scalar_lea.vmem %s2, %s427
  $region29: #{unet_layer_down.8} parent=0 // pred_fallthru
    _
  // Predicated region
  $region30: #{unet_layer_down.8} parent=0 // pred_check
    _
  $region31: #{unet_layer_down.8} parent=0 // pred_check_branch
    %430 = sbr.rel (0) target = $region33
  $region32: #{unet_layer_down.8} parent=0 // pred_region
    _
  $region33: #{unet_layer_down.8} parent=0 // pred_fallthru
    _
  // Predicated region
  $region34: #{unet_layer_down.8} parent=0 // pred_check
    _
  $region35: #{unet_layer_down.8} parent=0 // pred_check_branch
    %432 = sbr.rel (0) target = $region37
  $region36: #{unet_layer_down.8} parent=0 // pred_region
    _
  $region37: #{unet_layer_down.8} parent=0 // pred_fallthru
    _

</llo_original>
